<compile_context>
chip_gen: v6e
topology: v6e:2x2x1
jax: 0.10.0
libtpu: 0.0.40
codegen_flags: <defaults>
</compile_context>

<pallas_src>
import numpy as np
import jax
import jax.numpy as jnp
from jax.experimental import pallas as pl
from jax.experimental.pallas import tpu as pltpu

BN_EPS = 1e-5


def deepfm_kernel(x_ref, emb_ref, wlin_ref, blin_ref, w1_ref, w2_ref,
                  bias_ref, poole_ref, poolh_ref, out_ref):
    fh1 = w1_ref.shape[1]                      # F * H1

    emb = emb_ref[...]                         # (bt, F*D)  bf16, lane-dense
    ef = emb.astype(jnp.float32)

    # ---------------- Factorization Machine (f32 VPU/XLU math) ----------------
    # Linear term: broadcast-mul + lane reduce (no N=1 MXU matmul).
    lin = jnp.sum(x_ref[...] * wlin_ref[...], axis=1, keepdims=True) + blin_ref[...]
    # Field sums via a tiny 0/1 pooling matmul (bf16 in, exact f32 accumulation);
    # sum of squares is a single full lane reduce (no concat temporary).
    s = jnp.dot(emb, poole_ref[...], preferred_element_type=jnp.float32)       # (bt, D)
    sumsq = jnp.sum(ef * ef, axis=1, keepdims=True)                            # (bt, 1)
    fm = lin + 0.5 * (jnp.sum(s * s, axis=1, keepdims=True) - sumsq)           # (bt, 1)

    # -------- Deep part: two block-diagonal (BN-scale-folded) bf16 matmuls --------
    z = jnp.dot(emb, w1_ref[...], preferred_element_type=jnp.float32)          # (bt, F*H1)
    z = jnp.maximum(z + bias_ref[:, :fh1], 0.0)
    z = jnp.dot(z.astype(jnp.bfloat16), w2_ref[...],
                preferred_element_type=jnp.float32)                            # (bt, F*H2)
    z = jnp.maximum(z + bias_ref[:, fh1:], 0.0)

    # pooling_type='sum' over fields via the same pooling matmul; fm (bt, 1)
    # broadcasts across H2 exactly like torch's `fm_output + higher_output.sum(dim=1)`.
    pooled = jnp.dot(z.astype(jnp.bfloat16), poolh_ref[...],
                     preferred_element_type=jnp.float32)                       # (bt, H2)
    out_ref[...] = fm + pooled


def deepfm_forward(x, feature_emb, params, *, block_b=512):
    """DeepFM forward, eval-mode.  x: (B, C) f32, feature_emb: (B, F, D) f32."""
    B, C = x.shape
    Bq, F, D = feature_emb.shape
    assert Bq == B
    H1 = params["w1"].shape[1]
    H2 = params["w2"].shape[1]
    FD, FH1, FH2 = F * D, F * H1, F * H2
    f32, bf16 = jnp.float32, jnp.bfloat16

    # Fold eval-mode BatchNorm1d (per-field: dim=1 of the (B, F, H) activation, which
    # requires F == hidden dim, as in the PyTorch module) into per-field scales, then
    # fold the scales into block-diagonal weights and lane-dense bias rows.
    s1 = params["g1"] * jax.lax.rsqrt(params["v1"] + BN_EPS)                   # (F,)
    s2 = params["g2"] * jax.lax.rsqrt(params["v2"] + BN_EPS)                   # (F,)
    eye_f = jnp.eye(F, dtype=f32)
    w1_bd = jnp.einsum("fg,dh,f->fdgh", eye_f, params["w1"].astype(f32), s1
                       ).reshape(FD, FH1).astype(bf16)                         # (F*D, F*H1)
    w2_bd = jnp.einsum("fg,dh,f->fdgh", eye_f, params["w2"].astype(f32), s2
                       ).reshape(FH1, FH2).astype(bf16)                        # (F*H1, F*H2)
    bias1 = (params["b1"][None, :] * s1[:, None]
             + (params["beta1"] - params["m1"] * s1)[:, None]).reshape(1, FH1)
    bias2 = (params["b2"][None, :] * s2[:, None]
             + (params["beta2"] - params["m2"] * s2)[:, None]).reshape(1, FH2)
    biases = jnp.concatenate([bias1, bias2], axis=1).astype(f32)               # (1, FH1+FH2)

    # 0/1 field-pooling matrices (bf16 is exact for 0/1): FM field sums + deep pooling.
    pool_e = jnp.tile(jnp.eye(D, dtype=f32), (F, 1)).astype(bf16)              # (F*D, D)
    pool_h = jnp.tile(jnp.eye(H2, dtype=f32), (F, 1)).astype(bf16)             # (F*H2, H2)

    wlin_row = params["w_lin"].reshape(1, C).astype(f32)                       # (1, C)
    blin = params["b_lin"].reshape(1, 1).astype(f32)                           # (1, 1)

    # Lane-dense bf16 embedding slab (row-major reshape: free in HBM).
    emb_flat = feature_emb.reshape(B, FD).astype(bf16)
    x = x.astype(f32)

    # Batch tiling: pad the ragged tail (instead of one giant block) and keep >= 4
    # grid steps when possible so the DMA/compute pipeline (and the two v7x
    # TensorCores sharding the "parallel" axis) always has work to overlap.
    assert block_b % 8 == 0
    while block_b > 128 and -(-B // block_b) < 4:
        block_b //= 2
    n_blocks = -(-B // block_b)
    Bp = n_blocks * block_b
    if Bp != B:
        pad = Bp - B
        x_in = jnp.pad(x, ((0, pad), (0, 0)))
        emb_in = jnp.pad(emb_flat, ((0, pad), (0, 0)))
    else:
        x_in, emb_in = x, emb_flat

    def const(shape):
        return pl.BlockSpec(shape, lambda i: (0, 0))                           # VMEM-resident

    out = pl.pallas_call(
        deepfm_kernel,
        out_shape=jax.ShapeDtypeStruct((Bp, H2), f32),
        grid=(n_blocks,),
        in_specs=[
            pl.BlockSpec((block_b, C), lambda i: (i, 0)),      # x            (batch-tiled)
            pl.BlockSpec((block_b, FD), lambda i: (i, 0)),     # flat emb     (batch-tiled)
            const((1, C)),                                     # FM linear weight row
            const((1, 1)),                                     # FM linear bias
            const((FD, FH1)),                                  # block-diag W1 (BN folded)
            const((FH1, FH2)),                                 # block-diag W2 (BN folded)
            const((1, FH1 + FH2)),                             # folded lane-dense biases
            const((FD, D)),                                    # field-pool matrix (emb)
            const((FH2, H2)),                                  # field-pool matrix (deep)
        ],
        out_specs=pl.BlockSpec((block_b, H2), lambda i: (i, 0)),
        compiler_params=pltpu.CompilerParams(
            dimension_semantics=("parallel",),
        ),
    )(x_in, emb_in, wlin_row, blin, w1_bd, w2_bd, biases, pool_e, pool_h)

    return out[:B] if Bp != B else out


def deepfm_reference(x, feature_emb, params):
    """Pure-JAX f32 reference mirroring the PyTorch forward (eval-mode BatchNorm1d)."""
    lin = x @ params["w_lin"] + params["b_lin"]                                # (B, 1)
    s = feature_emb.sum(axis=1)
    ss = (feature_emb ** 2).sum(axis=1)
    cross = 0.5 * (s * s - ss).sum(axis=1, keepdims=True)
    fm = lin + cross                                                           # (B, 1)

    def bn(h, g, beta, m, v):
        # BatchNorm1d(num_features) on a 3-D (B, F, H) tensor normalizes dim=1 (fields).
        return ((h - m[None, :, None]) * jax.lax.rsqrt(v[None, :, None] + BN_EPS)
                * g[None, :, None] + beta[None, :, None])

    h = feature_emb @ params["w1"] + params["b1"]
    h = jnp.maximum(bn(h, params["g1"], params["beta1"], params["m1"], params["v1"]), 0.0)
    h = h @ params["w2"] + params["b2"]
    h = jnp.maximum(bn(h, params["g2"], params["beta2"], params["m2"], params["v2"]), 0.0)
    return fm + h.sum(axis=1)                                                  # (B, H2)


if __name__ == "__main__":
    # Shapes consistent with the module: hidden_dims=[16,16,16] -> embedding dim 16,
    # F=16 fields (required so BatchNorm1d(16) is well-formed on the (B, F, 16)
    # activation), len(category_list)=8 dense features.  B=600 is deliberately not a
    # multiple of the tile so the padded ragged-tail path and the multi-step
    # "parallel" batch grid are both exercised.
    B, C, F, D = 600, 8, 16, 16
    H1, H2 = 16, 16

    key = jax.random.PRNGKey(0)
    ks = jax.random.split(key, 16)

    x = jax.random.normal(ks[0], (B, C), jnp.float32)
    feature_emb = 0.5 * jax.random.normal(ks[1], (B, F, D), jnp.float32)

    params = {
        # FactorizationMachine: linear weight over categories + bias (bias_yn=True)
        "w_lin": 0.1 * jax.random.normal(ks[2], (C, 1), jnp.float32),
        "b_lin": jnp.array([0.01], jnp.float32),
        # Linear(16,16) + BatchNorm1d(16) block 1 (BN stats/affine are per-field)
        "w1": 0.25 * jax.random.normal(ks[3], (D, H1), jnp.float32),
        "b1": 0.1 * jax.random.normal(ks[4], (H1,), jnp.float32),
        "g1": 1.0 + 0.1 * jax.random.normal(ks[5], (F,), jnp.float32),
        "beta1": 0.1 * jax.random.normal(ks[6], (F,), jnp.float32),
        "m1": 0.05 * jax.random.normal(ks[7], (F,), jnp.float32),
        "v1": 1.0 + jax.nn.softplus(jax.random.normal(ks[8], (F,), jnp.float32)),
        # Linear(16,16) + BatchNorm1d(16) block 2
        "w2": 0.25 * jax.random.normal(ks[9], (H1, H2), jnp.float32),
        "b2": 0.1 * jax.random.normal(ks[10], (H2,), jnp.float32),
        "g2": 1.0 + 0.1 * jax.random.normal(ks[11], (F,), jnp.float32),
        "beta2": 0.1 * jax.random.normal(ks[12], (F,), jnp.float32),
        "m2": 0.05 * jax.random.normal(ks[13], (F,), jnp.float32),
        "v2": 1.0 + jax.nn.softplus(jax.random.normal(ks[14], (F,), jnp.float32)),
    }

    out = deepfm_forward(x, feature_emb, params)
    out = jax.block_until_ready(out)
    assert out.shape == (B, H2)

    # Reference uses the same bf16-quantized embeddings the kernel consumes, so the
    # comparison isolates the intentional bf16 input quantization from kernel bugs;
    # the tolerance covers the bf16 rounding of the folded weights / intermediates.
    emb_q = feature_emb.astype(jnp.bfloat16).astype(jnp.float32)
    ref = deepfm_reference(x, emb_q, params)
    np.testing.assert_allclose(np.asarray(out), np.asarray(ref), rtol=2e-2, atol=1e-1)

    print("KERNEL_OK")
</pallas_src>

<mosaic_0001>
module attributes {stable_mosaic.version = 11 : i64} {
  func.func @deepfm_kernel(%arg0: i32, %arg1: memref<128x8xf32, #tpu.memory_space<vmem>>, %arg2: memref<128x256xbf16, #tpu.memory_space<vmem>>, %arg3: memref<1x8xf32, #tpu.memory_space<vmem>>, %arg4: memref<1x1xf32, #tpu.memory_space<vmem>>, %arg5: memref<256x256xbf16, #tpu.memory_space<vmem>>, %arg6: memref<256x256xbf16, #tpu.memory_space<vmem>>, %arg7: memref<1x512xf32, #tpu.memory_space<vmem>>, %arg8: memref<256x16xbf16, #tpu.memory_space<vmem>>, %arg9: memref<256x16xbf16, #tpu.memory_space<vmem>>, %arg10: memref<128x16xf32, #tpu.memory_space<vmem>>) attributes {dimension_semantics = [#tpu.dimension_semantics<parallel>], iteration_bounds = array<i64: 5>, scalar_prefetch = 0 : i64, scratch_operands = 0 : i64, tpu.core_type = #tpu.core_type<tc>, window_params = [{transform_indices = @transform_0, window_bounds = array<i64: 128, 8>}, {transform_indices = @transform_1, window_bounds = array<i64: 128, 256>}, {pipeline_mode = #tpu.pipeline_mode<synchronous>, transform_indices = @transform_2, window_bounds = array<i64: 1, 8>}, {pipeline_mode = #tpu.pipeline_mode<synchronous>, transform_indices = @transform_3, window_bounds = array<i64: 1, 1>}, {pipeline_mode = #tpu.pipeline_mode<synchronous>, transform_indices = @transform_4, window_bounds = array<i64: 256, 256>}, {pipeline_mode = #tpu.pipeline_mode<synchronous>, transform_indices = @transform_5, window_bounds = array<i64: 256, 256>}, {pipeline_mode = #tpu.pipeline_mode<synchronous>, transform_indices = @transform_6, window_bounds = array<i64: 1, 512>}, {pipeline_mode = #tpu.pipeline_mode<synchronous>, transform_indices = @transform_7, window_bounds = array<i64: 256, 16>}, {pipeline_mode = #tpu.pipeline_mode<synchronous>, transform_indices = @transform_8, window_bounds = array<i64: 256, 16>}, {transform_indices = @transform_9, window_bounds = array<i64: 128, 16>}]} {
    %c0 = arith.constant 0 : index
    %c0_0 = arith.constant 0 : index
    %0 = vector.load %arg2[%c0, %c0_0] : memref<128x256xbf16, #tpu.memory_space<vmem>>, vector<128x256xbf16>
    %1 = arith.extf %0 : vector<128x256xbf16> to vector<128x256xf32>
    %c0_1 = arith.constant 0 : index
    %c0_2 = arith.constant 0 : index
    %2 = vector.load %arg1[%c0_1, %c0_2] : memref<128x8xf32, #tpu.memory_space<vmem>>, vector<128x8xf32>
    %c0_3 = arith.constant 0 : index
    %c0_4 = arith.constant 0 : index
    %3 = vector.load %arg3[%c0_3, %c0_4] : memref<1x8xf32, #tpu.memory_space<vmem>>, vector<1x8xf32>
    %4 = vector.broadcast %3 : vector<1x8xf32> to vector<128x8xf32>
    %5 = arith.mulf %2, %4 : vector<128x8xf32>
    %cst = arith.constant dense<0.000000e+00> : vector<128xf32>
    %6 = vector.multi_reduction <add>, %5, %cst [1] : vector<128x8xf32> to vector<128xf32>
    %7 = vector.shape_cast %6 : vector<128xf32> to vector<128x1xf32>
    %c0_5 = arith.constant 0 : index
    %c0_6 = arith.constant 0 : index
    %8 = vector.load %arg4[%c0_5, %c0_6] : memref<1x1xf32, #tpu.memory_space<vmem>>, vector<1x1xf32>
    %9 = vector.broadcast %8 : vector<1x1xf32> to vector<128x1xf32>
    %10 = arith.addf %7, %9 : vector<128x1xf32>
    %c0_7 = arith.constant 0 : index
    %c0_8 = arith.constant 0 : index
    %11 = vector.load %arg8[%c0_7, %c0_8] : memref<256x16xbf16, #tpu.memory_space<vmem>>, vector<256x16xbf16>
    %cst_9 = arith.constant dense<0.000000e+00> : vector<128x16xf32>
    %12 = tpu.matmul %0, %11, %cst_9 {dimension_numbers = #tpu.dot_dimension_numbers<[1], [0], [0], [1], [0, 0, 1, 1], [], []>} : vector<128x256xbf16>, vector<256x16xbf16>, vector<128x16xf32> -> vector<128x16xf32>
    %13 = arith.mulf %1, %1 : vector<128x256xf32>
    %cst_10 = arith.constant dense<0.000000e+00> : vector<128xf32>
    %14 = vector.multi_reduction <add>, %13, %cst_10 [1] : vector<128x256xf32> to vector<128xf32>
    %15 = vector.shape_cast %14 : vector<128xf32> to vector<128x1xf32>
    %16 = arith.mulf %12, %12 : vector<128x16xf32>
    %cst_11 = arith.constant dense<0.000000e+00> : vector<128xf32>
    %17 = vector.multi_reduction <add>, %16, %cst_11 [1] : vector<128x16xf32> to vector<128xf32>
    %18 = vector.shape_cast %17 : vector<128xf32> to vector<128x1xf32>
    %19 = arith.subf %18, %15 : vector<128x1xf32>
    %cst_12 = arith.constant 5.000000e-01 : f32
    %20 = vector.broadcast %cst_12 : f32 to vector<128x1xf32>
    %21 = arith.mulf %20, %19 : vector<128x1xf32>
    %22 = arith.addf %10, %21 : vector<128x1xf32>
    %c0_13 = arith.constant 0 : index
    %c0_14 = arith.constant 0 : index
    %23 = vector.load %arg5[%c0_13, %c0_14] : memref<256x256xbf16, #tpu.memory_space<vmem>>, vector<256x256xbf16>
    %cst_15 = arith.constant dense<0.000000e+00> : vector<128x256xf32>
    %24 = tpu.matmul %0, %23, %cst_15 {dimension_numbers = #tpu.dot_dimension_numbers<[1], [0], [0], [1], [0, 0, 1, 1], [], []>} : vector<128x256xbf16>, vector<256x256xbf16>, vector<128x256xf32> -> vector<128x256xf32>
    %c0_16 = arith.constant 0 : index
    %c0_17 = arith.constant 0 : index
    %25 = vector.load %arg7[%c0_16, %c0_17] : memref<1x512xf32, #tpu.memory_space<vmem>>, vector<1x256xf32>
    %26 = vector.broadcast %25 : vector<1x256xf32> to vector<128x256xf32>
    %27 = arith.addf %24, %26 : vector<128x256xf32>
    %cst_18 = arith.constant 0.000000e+00 : f32
    %28 = vector.broadcast %cst_18 : f32 to vector<128x256xf32>
    %29 = arith.maximumf %27, %28 : vector<128x256xf32>
    %30 = arith.truncf %29 : vector<128x256xf32> to vector<128x256xbf16>
    %c0_19 = arith.constant 0 : index
    %c0_20 = arith.constant 0 : index
    %31 = vector.load %arg6[%c0_19, %c0_20] : memref<256x256xbf16, #tpu.memory_space<vmem>>, vector<256x256xbf16>
    %cst_21 = arith.constant dense<0.000000e+00> : vector<128x256xf32>
    %32 = tpu.matmul %30, %31, %cst_21 {dimension_numbers = #tpu.dot_dimension_numbers<[1], [0], [0], [1], [0, 0, 1, 1], [], []>} : vector<128x256xbf16>, vector<256x256xbf16>, vector<128x256xf32> -> vector<128x256xf32>
    %c0_22 = arith.constant 0 : index
    %c256 = arith.constant 256 : index
    %33 = vector.load %arg7[%c0_22, %c256] : memref<1x512xf32, #tpu.memory_space<vmem>>, vector<1x256xf32>
    %34 = vector.broadcast %33 : vector<1x256xf32> to vector<128x256xf32>
    %35 = arith.addf %32, %34 : vector<128x256xf32>
    %cst_23 = arith.constant 0.000000e+00 : f32
    %36 = vector.broadcast %cst_23 : f32 to vector<128x256xf32>
    %37 = arith.maximumf %35, %36 : vector<128x256xf32>
    %38 = arith.truncf %37 : vector<128x256xf32> to vector<128x256xbf16>
    %c0_24 = arith.constant 0 : index
    %c0_25 = arith.constant 0 : index
    %39 = vector.load %arg9[%c0_24, %c0_25] : memref<256x16xbf16, #tpu.memory_space<vmem>>, vector<256x16xbf16>
    %cst_26 = arith.constant dense<0.000000e+00> : vector<128x16xf32>
    %40 = tpu.matmul %38, %39, %cst_26 {dimension_numbers = #tpu.dot_dimension_numbers<[1], [0], [0], [1], [0, 0, 1, 1], [], []>} : vector<128x256xbf16>, vector<256x16xbf16>, vector<128x16xf32> -> vector<128x16xf32>
    %41 = vector.broadcast %22 : vector<128x1xf32> to vector<128x16xf32>
    %42 = arith.addf %41, %40 : vector<128x16xf32>
    %c0_27 = arith.constant 0 : index
    %c0_28 = arith.constant 0 : index
    %43 = vector.load %arg10[%c0_27, %c0_28] : memref<128x16xf32, #tpu.memory_space<vmem>>, vector<128x16xf32>
    tpu.vector_store %arg10[%c0_27, %c0_28], %42 {strides = array<i32>} : memref<128x16xf32, #tpu.memory_space<vmem>>, vector<128x16xf32>,
    return
  }
  func.func @transform_0(%arg0: i32) -> (i32, i32) {
    %c0_i32 = arith.constant 0 : i32
    %c0_i32_0 = arith.constant 0 : i32
    return %arg0, %c0_i32 : i32, i32
  }
  func.func @transform_1(%arg0: i32) -> (i32, i32) {
    %c0_i32 = arith.constant 0 : i32
    %c0_i32_0 = arith.constant 0 : i32
    return %arg0, %c0_i32 : i32, i32
  }
  func.func @transform_2(%arg0: i32) -> (i32, i32) {
    %c0_i32 = arith.constant 0 : i32
    %c0_i32_0 = arith.constant 0 : i32
    %c0_i32_1 = arith.constant 0 : i32
    return %c0_i32, %c0_i32_0 : i32, i32
  }
  func.func @transform_3(%arg0: i32) -> (i32, i32) {
    %c0_i32 = arith.constant 0 : i32
    %c0_i32_0 = arith.constant 0 : i32
    %c0_i32_1 = arith.constant 0 : i32
    return %c0_i32, %c0_i32_0 : i32, i32
  }
  func.func @transform_4(%arg0: i32) -> (i32, i32) {
    %c0_i32 = arith.constant 0 : i32
    %c0_i32_0 = arith.constant 0 : i32
    %c0_i32_1 = arith.constant 0 : i32
    return %c0_i32, %c0_i32_0 : i32, i32
  }
  func.func @transform_5(%arg0: i32) -> (i32, i32) {
    %c0_i32 = arith.constant 0 : i32
    %c0_i32_0 = arith.constant 0 : i32
    %c0_i32_1 = arith.constant 0 : i32
    return %c0_i32, %c0_i32_0 : i32, i32
  }
  func.func @transform_6(%arg0: i32) -> (i32, i32) {
    %c0_i32 = arith.constant 0 : i32
    %c0_i32_0 = arith.constant 0 : i32
    %c0_i32_1 = arith.constant 0 : i32
    return %c0_i32, %c0_i32_0 : i32, i32
  }
  func.func @transform_7(%arg0: i32) -> (i32, i32) {
    %c0_i32 = arith.constant 0 : i32
    %c0_i32_0 = arith.constant 0 : i32
    %c0_i32_1 = arith.constant 0 : i32
    return %c0_i32, %c0_i32_0 : i32, i32
  }
  func.func @transform_8(%arg0: i32) -> (i32, i32) {
    %c0_i32 = arith.constant 0 : i32
    %c0_i32_0 = arith.constant 0 : i32
    %c0_i32_1 = arith.constant 0 : i32
    return %c0_i32, %c0_i32_0 : i32, i32
  }
  func.func @transform_9(%arg0: i32) -> (i32, i32) {
    %c0_i32 = arith.constant 0 : i32
    %c0_i32_0 = arith.constant 0 : i32
    return %arg0, %c0_i32 : i32, i32
  }
}

</mosaic_0001>

<llo_original>
// kernel: tpu_custom_call.1
$region0: #{tpu_custom_call.1}
  #allocation0 [shape = 'u32[]', space=smem, size = 0x4, offset = 0x4, fixed_abs, tag = 'smem constant byte address 0x4 - core index']
  #allocation1 [shape = 'u32[144,128]{1,0:T(1,128)}', space=vmem, size = 0x12000, scoped, tag = 'internal scratch']
  #allocation2 [shape = 'f32[1,1]{1,0:T(1,128)S(1)}', space=vmem, size = 0x200, scoped, tag = 'scoped memory for tpu_custom_call.1']
  %s0 = inlined_call_operand.vmem [shape: f32[640,8], index: 0, kind: input, shape index: {}]
  %s1 = inlined_call_operand.vmem [shape: bf16[640,256], index: 1, kind: input, shape index: {}]
  %s2 = inlined_call_operand.vmem [shape: f32[1,8], index: 2, kind: input, shape index: {}]
  %s3 = inlined_call_operand.<no memory space> [shape: f32[1,1], index: 3, kind: input, shape index: {}]
  %s4 = inlined_call_operand.vmem [shape: bf16[256,256], index: 4, kind: input, shape index: {}]
  %s5 = inlined_call_operand.hbm [shape: bf16[256,256], index: 5, kind: input, shape index: {}]
  %s6 = inlined_call_operand.vmem [shape: f32[1,512], index: 6, kind: input, shape index: {}]
  %s7 = inlined_call_operand.vmem [shape: bf16[256,16], index: 7, kind: input, shape index: {}]
  %s8 = inlined_call_operand.vmem [shape: bf16[256,16], index: 8, kind: input, shape index: {}]
  %s9 = inlined_call_operand.vmem [shape: f32[640,16], index: 9, kind: output, shape index: {}]
  %s10 = sld [smem:[#allocation0]]
  $region73: #{tpu_custom_call.1} parent=0
    _
  %s12 = ssub.s32 1, %s10
  %s13 = scalar_select 0, %s12, %s10
  %v14 = vstv %s3
  %15 = vst [vmem:[#allocation2] sm:$0x1] %v14
  $region1: #{tpu_custom_call.1} parent=0
    #allocation3 [shape = 'u8[131072]{0}', space=vmem, size = 0x20000, scoped, tag = 'input window, operand 5, single buffered']
    #allocation4 [shape = 's32[2]{0}', space=sflag, size = 0x8, scoped, tag = 'scoped memory for tpu_custom_call.1']
    %16 = vsyncpa [#allocation4], 0
    loop: start=0, step=1, limit=7
    $region2: #{tpu_custom_call.1} parent=1 // loop_pre_header
      _
    $region3: #{tpu_custom_call.1} parent=1 // loop_header
      %s18 = sphi 0, %s22
      %p19 = scmp.ge.s32.totalorder %s18, 7
      %s28 = sphi 0, %s30
      %s31 = sphi 0, %s28
      %s32 = sphi 0, %s31
      %s48 = sphi 0, %s32
      %s54 = sphi 0, %s56
      %s57 = sphi 0, %s54
      %s58 = sphi 0, %s57
      %s74 = sphi 0, %s58
      %s78 = sphi 0, %s78
      %s80 = sphi 0, %s78
      %s81 = sphi 0, %s80
      %s95 = sphi 0, %s81
      %s99 = sphi 0, %s99
      %s101 = sphi 0, %s99
      %s102 = sphi 0, %s101
      %s116 = sphi 0, %s102
      %s120 = sphi 0, %s120
      %s122 = sphi 0, %s120
      %s123 = sphi 0, %s122
      %s137 = sphi 0, %s123
      %s141 = sphi 0, %s141
      %s143 = sphi 0, %s141
      %s144 = sphi 0, %s143
      %s158 = sphi 0, %s144
      %s162 = sphi 0, %s162
      %s164 = sphi 0, %s162
      %s165 = sphi 0, %s164
      %s179 = sphi 0, %s165
      %s183 = sphi 0, %s183
      %s185 = sphi 0, %s183
      %s186 = sphi 0, %s185
      %s200 = sphi 0, %s186
      %s204 = sphi 0, %s204
      %s206 = sphi 0, %s204
      %s207 = sphi 0, %s206
      %s221 = sphi 0, %s207
      %s227 = sphi 0, %s229
      %s230 = sphi 0, %s227
      %s231 = sphi 0, %s230
      %s247 = sphi 0, %s231
    $region4: #{tpu_custom_call.1} parent=1 // loop_header_branch
      %21 = sbr.rel (%p19) target = $region8
    $region5: #{tpu_custom_call.1} parent=1 // loop_body
      %s23 = ssub.s32 %s18, 1
      %s24 = ssub.s32 %s18, 2
      %s25 = sadd.s32 %s18, 1
      %s26 = ssub.s32 %s18, %s25
      %p27 = scmp.eq.s32.totalorder %s26, 0
      %s29 = sadd.s32 %s28, 1
      %s30 = scalar_select %p27, %s28, %s29
      %p33 = pneg %p27
      %p34 = scmp.eq.s32.totalorder %s18, 4
      %p35 = por %p33, %p34
      %p36 = scmp.ne.s32.totalorder %s28, %s31
      %p37 = scmp.eq.s32.totalorder %s18, 0
      %p38 = por %p36, %p37
      %p39 = scmp.ne.s32.totalorder %s28, %s31
      %p40 = scmp.eq.s32.totalorder %s23, 4
      %p41 = por %p39, %p40
      %p42 = scmp.ne.s32.totalorder %s31, %s32
      %p43 = scmp.eq.s32.totalorder %s23, 0
      %p44 = por %p42, %p43
      %p45 = scmp.ne.s32.totalorder %s31, %s32
      %p46 = scmp.eq.s32.totalorder %s24, 4
      %p47 = por %p45, %p46
      %p49 = scmp.ne.s32.totalorder %s32, %s48
      %p50 = scmp.eq.s32.totalorder %s24, 0
      %p51 = por %p49, %p50
      %s52 = ssub.s32 %s18, %s25
      %p53 = scmp.eq.s32.totalorder %s52, 0
      %s55 = sadd.s32 %s54, 1
      %s56 = scalar_select %p53, %s54, %s55
      %p59 = pneg %p53
      %p60 = scmp.eq.s32.totalorder %s18, 4
      %p61 = por %p59, %p60
      %p62 = scmp.ne.s32.totalorder %s54, %s57
      %p63 = scmp.eq.s32.totalorder %s18, 0
      %p64 = por %p62, %p63
      %p65 = scmp.ne.s32.totalorder %s54, %s57
      %p66 = scmp.eq.s32.totalorder %s23, 4
      %p67 = por %p65, %p66
      %p68 = scmp.ne.s32.totalorder %s57, %s58
      %p69 = scmp.eq.s32.totalorder %s23, 0
      %p70 = por %p68, %p69
      %p71 = scmp.ne.s32.totalorder %s57, %s58
      %p72 = scmp.eq.s32.totalorder %s24, 4
      %p73 = por %p71, %p72
      %p75 = scmp.ne.s32.totalorder %s58, %s74
      %p76 = scmp.eq.s32.totalorder %s24, 0
      %p77 = por %p75, %p76
      %s79 = sadd.s32 %s78, 1
      %p82 = scmp.eq.s32.totalorder %s18, 4
      %p83 = scmp.ne.s32.totalorder %s78, %s80
      %p84 = scmp.eq.s32.totalorder %s18, 0
      %p85 = por %p83, %p84
      %p86 = scmp.ne.s32.totalorder %s78, %s80
      %p87 = scmp.eq.s32.totalorder %s23, 4
      %p88 = por %p86, %p87
      %p89 = scmp.ne.s32.totalorder %s80, %s81
      %p90 = scmp.eq.s32.totalorder %s23, 0
      %p91 = por %p89, %p90
      %p92 = scmp.ne.s32.totalorder %s80, %s81
      %p93 = scmp.eq.s32.totalorder %s24, 4
      %p94 = por %p92, %p93
      %p96 = scmp.ne.s32.totalorder %s81, %s95
      %p97 = scmp.eq.s32.totalorder %s24, 0
      %p98 = por %p96, %p97
      %s100 = sadd.s32 %s99, 1
      %p103 = scmp.eq.s32.totalorder %s18, 4
      %p104 = scmp.ne.s32.totalorder %s99, %s101
      %p105 = scmp.eq.s32.totalorder %s18, 0
      %p106 = por %p104, %p105
      %p107 = scmp.ne.s32.totalorder %s99, %s101
      %p108 = scmp.eq.s32.totalorder %s23, 4
      %p109 = por %p107, %p108
      %p110 = scmp.ne.s32.totalorder %s101, %s102
      %p111 = scmp.eq.s32.totalorder %s23, 0
      %p112 = por %p110, %p111
      %p113 = scmp.ne.s32.totalorder %s101, %s102
      %p114 = scmp.eq.s32.totalorder %s24, 4
      %p115 = por %p113, %p114
      %p117 = scmp.ne.s32.totalorder %s102, %s116
      %p118 = scmp.eq.s32.totalorder %s24, 0
      %p119 = por %p117, %p118
      %s121 = sadd.s32 %s120, 1
      %p124 = scmp.eq.s32.totalorder %s18, 4
      %p125 = scmp.ne.s32.totalorder %s120, %s122
      %p126 = scmp.eq.s32.totalorder %s18, 0
      %p127 = por %p125, %p126
      %p128 = scmp.ne.s32.totalorder %s120, %s122
      %p129 = scmp.eq.s32.totalorder %s23, 4
      %p130 = por %p128, %p129
      %p131 = scmp.ne.s32.totalorder %s122, %s123
      %p132 = scmp.eq.s32.totalorder %s23, 0
      %p133 = por %p131, %p132
      %p134 = scmp.ne.s32.totalorder %s122, %s123
      %p135 = scmp.eq.s32.totalorder %s24, 4
      %p136 = por %p134, %p135
      %p138 = scmp.ne.s32.totalorder %s123, %s137
      %p139 = scmp.eq.s32.totalorder %s24, 0
      %p140 = por %p138, %p139
      %s142 = sadd.s32 %s141, 1
      %p145 = scmp.eq.s32.totalorder %s18, 4
      %p146 = scmp.ne.s32.totalorder %s141, %s143
      %p147 = scmp.eq.s32.totalorder %s18, 0
      %p148 = por %p146, %p147
      %p149 = scmp.ne.s32.totalorder %s141, %s143
      %p150 = scmp.eq.s32.totalorder %s23, 4
      %p151 = por %p149, %p150
      %p152 = scmp.ne.s32.totalorder %s143, %s144
      %p153 = scmp.eq.s32.totalorder %s23, 0
      %p154 = por %p152, %p153
      %p155 = scmp.ne.s32.totalorder %s143, %s144
      %p156 = scmp.eq.s32.totalorder %s24, 4
      %p157 = por %p155, %p156
      %p159 = scmp.ne.s32.totalorder %s144, %s158
      %p160 = scmp.eq.s32.totalorder %s24, 0
      %p161 = por %p159, %p160
      %s163 = sadd.s32 %s162, 1
      %p166 = scmp.eq.s32.totalorder %s18, 4
      %p167 = scmp.ne.s32.totalorder %s162, %s164
      %p168 = scmp.eq.s32.totalorder %s18, 0
      %p169 = por %p167, %p168
      %p170 = scmp.ne.s32.totalorder %s162, %s164
      %p171 = scmp.eq.s32.totalorder %s23, 4
      %p172 = por %p170, %p171
      %p173 = scmp.ne.s32.totalorder %s164, %s165
      %p174 = scmp.eq.s32.totalorder %s23, 0
      %p175 = por %p173, %p174
      %p176 = scmp.ne.s32.totalorder %s164, %s165
      %p177 = scmp.eq.s32.totalorder %s24, 4
      %p178 = por %p176, %p177
      %p180 = scmp.ne.s32.totalorder %s165, %s179
      %p181 = scmp.eq.s32.totalorder %s24, 0
      %p182 = por %p180, %p181
      %s184 = sadd.s32 %s183, 1
      %p187 = scmp.eq.s32.totalorder %s18, 4
      %p188 = scmp.ne.s32.totalorder %s183, %s185
      %p189 = scmp.eq.s32.totalorder %s18, 0
      %p190 = por %p188, %p189
      %p191 = scmp.ne.s32.totalorder %s183, %s185
      %p192 = scmp.eq.s32.totalorder %s23, 4
      %p193 = por %p191, %p192
      %p194 = scmp.ne.s32.totalorder %s185, %s186
      %p195 = scmp.eq.s32.totalorder %s23, 0
      %p196 = por %p194, %p195
      %p197 = scmp.ne.s32.totalorder %s185, %s186
      %p198 = scmp.eq.s32.totalorder %s24, 4
      %p199 = por %p197, %p198
      %p201 = scmp.ne.s32.totalorder %s186, %s200
      %p202 = scmp.eq.s32.totalorder %s24, 0
      %p203 = por %p201, %p202
      %s205 = sadd.s32 %s204, 1
      %p208 = scmp.eq.s32.totalorder %s18, 4
      %p209 = scmp.ne.s32.totalorder %s204, %s206
      %p210 = scmp.eq.s32.totalorder %s18, 0
      %p211 = por %p209, %p210
      %p212 = scmp.ne.s32.totalorder %s204, %s206
      %p213 = scmp.eq.s32.totalorder %s23, 4
      %p214 = por %p212, %p213
      %p215 = scmp.ne.s32.totalorder %s206, %s207
      %p216 = scmp.eq.s32.totalorder %s23, 0
      %p217 = por %p215, %p216
      %p218 = scmp.ne.s32.totalorder %s206, %s207
      %p219 = scmp.eq.s32.totalorder %s24, 4
      %p220 = por %p218, %p219
      %p222 = scmp.ne.s32.totalorder %s207, %s221
      %p223 = scmp.eq.s32.totalorder %s24, 0
      %p224 = por %p222, %p223
      %s225 = ssub.s32 %s18, %s25
      %p226 = scmp.eq.s32.totalorder %s225, 0
      %s228 = sadd.s32 %s227, 1
      %s229 = scalar_select %p226, %s227, %s228
      %p232 = pneg %p226
      %p233 = scmp.eq.s32.totalorder %s18, 4
      %p234 = por %p232, %p233
      %p235 = scmp.ne.s32.totalorder %s227, %s230
      %p236 = scmp.eq.s32.totalorder %s18, 0
      %p237 = por %p235, %p236
      %p238 = scmp.ne.s32.totalorder %s227, %s230
      %p239 = scmp.eq.s32.totalorder %s23, 4
      %p240 = por %p238, %p239
      %p241 = scmp.ne.s32.totalorder %s230, %s231
      %p242 = scmp.eq.s32.totalorder %s23, 0
      %p243 = por %p241, %p242
      %p244 = scmp.ne.s32.totalorder %s230, %s231
      %p245 = scmp.eq.s32.totalorder %s24, 4
      %p246 = por %p244, %p245
      %p248 = scmp.ne.s32.totalorder %s231, %s247
      %p249 = scmp.eq.s32.totalorder %s24, 0
      %p250 = por %p248, %p249
      %p251 = scmp.le.s32.totalorder 1, %s18
      %p252 = scmp.lt.s32.totalorder %s18, 6
      %p253 = pnand %p251, %p252
      %p254 = pneg %p253
      // Predicated region
      $region9: #{tpu_custom_call.1} parent=5 // pred_check
        _
      $region10: #{tpu_custom_call.1} parent=5 // pred_check_branch
        %256 = sbr.rel (%p253) target = $region12
      $region11: #{tpu_custom_call.1} parent=5 // pred_region
        %s257 = ssub.s32 %s18, 1
        // Predicated region
        $region13: #{tpu_custom_call.1} parent=11 // pred_check
          %p258 = pneg %p91
        $region14: #{tpu_custom_call.1} parent=11 // pred_check_branch
          %260 = sbr.rel (%p258) target = $region16
        $region15: #{tpu_custom_call.1} parent=11 // pred_region
          _
        $region16: #{tpu_custom_call.1} parent=11 // pred_fallthru
          _
        // Predicated region
        $region17: #{tpu_custom_call.1} parent=11 // pred_check
          %p261 = pneg %p112
        $region18: #{tpu_custom_call.1} parent=11 // pred_check_branch
          %263 = sbr.rel (%p261) target = $region20
        $region19: #{tpu_custom_call.1} parent=11 // pred_region
          _
        $region20: #{tpu_custom_call.1} parent=11 // pred_fallthru
          _
        // Predicated region
        $region21: #{tpu_custom_call.1} parent=11 // pred_check
          %p264 = pneg %p133
        $region22: #{tpu_custom_call.1} parent=11 // pred_check_branch
          %266 = sbr.rel (%p264) target = $region24
        $region23: #{tpu_custom_call.1} parent=11 // pred_region
          _
        $region24: #{tpu_custom_call.1} parent=11 // pred_fallthru
          _
        // Predicated region
        $region25: #{tpu_custom_call.1} parent=11 // pred_check
          %p267 = pneg %p154
        $region26: #{tpu_custom_call.1} parent=11 // pred_check_branch
          %269 = sbr.rel (%p267) target = $region28
        $region27: #{tpu_custom_call.1} parent=11 // pred_region
          %s271 = ssub.s32 4096, 4096
          %272 = vsyncadd [#allocation4], %s271
          %s273 = sshll.u32 [#allocation3], 4
          %s274 = int_to_ptr.vmem [resolvable:$true] %s273
          %279 = dma.hbm_to_vmem [thread:$0]  %s5, 4096, %s274, [#allocation4], 128, 128, 8
        $region28: #{tpu_custom_call.1} parent=11 // pred_fallthru
          _
        // Predicated region
        $region29: #{tpu_custom_call.1} parent=11 // pred_check
          %p280 = pneg %p175
        $region30: #{tpu_custom_call.1} parent=11 // pred_check_branch
          %282 = sbr.rel (%p280) target = $region32
        $region31: #{tpu_custom_call.1} parent=11 // pred_region
          _
        $region32: #{tpu_custom_call.1} parent=11 // pred_fallthru
          _
        // Predicated region
        $region33: #{tpu_custom_call.1} parent=11 // pred_check
          %p283 = pneg %p196
        $region34: #{tpu_custom_call.1} parent=11 // pred_check_branch
          %285 = sbr.rel (%p283) target = $region36
        $region35: #{tpu_custom_call.1} parent=11 // pred_region
          _
        $region36: #{tpu_custom_call.1} parent=11 // pred_fallthru
          _
        // Predicated region
        $region37: #{tpu_custom_call.1} parent=11 // pred_check
          %p286 = pneg %p217
        $region38: #{tpu_custom_call.1} parent=11 // pred_check_branch
          %288 = sbr.rel (%p286) target = $region40
        $region39: #{tpu_custom_call.1} parent=11 // pred_region
          _
        $region40: #{tpu_custom_call.1} parent=11 // pred_fallthru
          _
      $region12: #{tpu_custom_call.1} parent=5 // pred_fallthru
        _
      %p289 = scmp.lt.s32.totalorder %s18, 5
      // Predicated region
      $region41: #{tpu_custom_call.1} parent=5 // pred_check
        %p290 = pneg %p289
      $region42: #{tpu_custom_call.1} parent=5 // pred_check_branch
        %292 = sbr.rel (%p290) target = $region44
      $region43: #{tpu_custom_call.1} parent=5 // pred_region
        // Predicated region
        $region45: #{tpu_custom_call.1} parent=43 // pred_check
          %p293 = pneg %p38
        $region46: #{tpu_custom_call.1} parent=43 // pred_check_branch
          %295 = sbr.rel (%p293) target = $region48
        $region47: #{tpu_custom_call.1} parent=43 // pred_region
          %s296 = smul.u32 16, %s18
          %p297 = scmp.lt.s32.totalorder %s296, 79
          %s298 = scalar_select %p297, %s296, 79
          %s299 = smul.addr %s298, 8
          %s300 = scalar_lea.vmem %s0, %s299
          %s301 = smul.u32 16, %s18
        $region48: #{tpu_custom_call.1} parent=43 // pred_fallthru
          _
        // Predicated region
        $region49: #{tpu_custom_call.1} parent=43 // pred_check
          %p302 = pneg %p64
        $region50: #{tpu_custom_call.1} parent=43 // pred_check_branch
          %304 = sbr.rel (%p302) target = $region52
        $region51: #{tpu_custom_call.1} parent=43 // pred_region
          %s305 = smul.u32 16, %s18
          %p306 = scmp.lt.s32.totalorder %s305, 79
          %s307 = scalar_select %p306, %s305, 79
          %s308 = smul.addr %s307, 2
          %s309 = smul.addr %s308, 4
          %s310 = scalar_lea.vmem %s1, %s309
          %s311 = smul.u32 16, %s18
        $region52: #{tpu_custom_call.1} parent=43 // pred_fallthru
          _
      $region44: #{tpu_custom_call.1} parent=5 // pred_fallthru
        _
      %p312 = scmp.le.s32.totalorder 1, %s18
      %p313 = scmp.lt.s32.totalorder %s18, 6
      %p314 = pnand %p312, %p313
      %p315 = pneg %p314
      // Predicated region
      $region53: #{tpu_custom_call.1} parent=5 // pred_check
        _
      $region54: #{tpu_custom_call.1} parent=5 // pred_check_branch
        %317 = sbr.rel (%p314) target = $region56
      $region55: #{tpu_custom_call.1} parent=5 // pred_region
        %s318 = ssub.s32 %s18, 1
        // Predicated region
        $region57: #{tpu_custom_call.1} parent=55 // pred_check
          %p319 = pneg %p154
        $region58: #{tpu_custom_call.1} parent=55 // pred_check_branch
          %321 = sbr.rel (%p319) target = $region60
        $region59: #{tpu_custom_call.1} parent=55 // pred_region
          %322 = dma.done [#allocation4], 4096
        $region60: #{tpu_custom_call.1} parent=55 // pred_fallthru
          _
        %s323 = smul.u32 16, %s23
        %p324 = scmp.lt.s32.totalorder %s323, 79
        %s325 = scalar_select %p324, %s323, 79
        %s326 = smul.addr %s325, 8
        %s327 = scalar_lea.vmem %s0, %s326
        %p328 = pneg %p44
        %p329 = pneg %p41
        %s330 = smul.u32 16, %s23
        %p331 = scmp.lt.s32.totalorder %s330, 79
        %s332 = scalar_select %p331, %s330, 79
        %s333 = smul.addr %s332, 2
        %s334 = smul.addr %s333, 4
        %s335 = scalar_lea.vmem %s1, %s334
        %p336 = pneg %p70
        %p337 = pneg %p67
        %p338 = pneg %p91
        %p339 = pneg %p88
        %p340 = pneg %p112
        %p341 = pneg %p109
        %p342 = pneg %p133
        %p343 = pneg %p130
        %p344 = pneg %p154
        %p345 = pneg %p151
        %p346 = pneg %p175
        %p347 = pneg %p172
        %p348 = pneg %p196
        %p349 = pneg %p193
        %p350 = pneg %p217
        %p351 = pneg %p214
        %p352 = pneg %p243
        %p353 = pneg %p240
        %s354 = smul.u32 16, %s23
        %p355 = scmp.lt.s32.totalorder %s354, 79
        %s356 = scalar_select %p355, %s354, 79
        %s357 = smul.addr %s356, 8
        %s358 = scalar_lea.vmem %s9, %s357
        %s359 = smul.u32 16, %s23
        %p360 = scmp.lt.s32.totalorder %s359, 79
        %s361 = scalar_select %p360, %s359, 79
        %s362 = smul.addr %s361, 8
        %s363 = scalar_lea.vmem %s0, %s362
        %s364 = smul.u32 16, %s23
        %s365 = smul.u32 16, %s23
        %p366 = scmp.lt.s32.totalorder %s365, 79
        %s367 = scalar_select %p366, %s365, 79
        %s368 = smul.addr %s367, 2
        %s369 = smul.addr %s368, 4
        %s370 = scalar_lea.vmem %s1, %s369
        %s371 = smul.u32 16, %s23
        %s372 = smul.u32 16, %s23
        %p373 = scmp.lt.s32.totalorder %s372, 79
        %s374 = scalar_select %p373, %s372, 79
        %s375 = smul.addr %s374, 8
        %s376 = scalar_lea.vmem %s9, %s375
        %s377 = smul.u32 16, %s23
        %v379 = vld [vmem:[%s370] sm:$0xff]
        %v380 = vld [vmem:[%s370 + $0x8] sm:$0xff]
        %v381 = vld [vmem:[%s370 + $0x10] sm:$0xff]
        %v382 = vld [vmem:[%s370 + $0x18] sm:$0xff]
        %v383 = vld [vmem:[%s370 + $0x20] sm:$0xff]
        %v384 = vld [vmem:[%s370 + $0x28] sm:$0xff]
        %v385 = vld [vmem:[%s370 + $0x30] sm:$0xff]
        %v386 = vld [vmem:[%s370 + $0x38] sm:$0xff]
        %v387 = vld [vmem:[%s370 + $0x40] sm:$0xff]
        %v388 = vld [vmem:[%s370 + $0x48] sm:$0xff]
        %v389 = vld [vmem:[%s370 + $0x50] sm:$0xff]
        %v390 = vld [vmem:[%s370 + $0x58] sm:$0xff]
        %v391 = vld [vmem:[%s370 + $0x60] sm:$0xff]
        %v392 = vld [vmem:[%s370 + $0x68] sm:$0xff]
        %v393 = vld [vmem:[%s370 + $0x70] sm:$0xff]
        %v394 = vld [vmem:[%s370 + $0x78] sm:$0xff]
        %v395 = vunpack.c.l.bf16 %v379
        %v396 = vunpack.c.h.bf16 %v379
        %v397 = vunpack.c.l.bf16 %v380
        %v398 = vunpack.c.h.bf16 %v380
        %v399 = vunpack.c.l.bf16 %v381
        %v400 = vunpack.c.h.bf16 %v381
        %v401 = vunpack.c.l.bf16 %v382
        %v402 = vunpack.c.h.bf16 %v382
        %v403 = vunpack.c.l.bf16 %v383
        %v404 = vunpack.c.h.bf16 %v383
        %v405 = vunpack.c.l.bf16 %v384
        %v406 = vunpack.c.h.bf16 %v384
        %v407 = vunpack.c.l.bf16 %v385
        %v408 = vunpack.c.h.bf16 %v385
        %v409 = vunpack.c.l.bf16 %v386
        %v410 = vunpack.c.h.bf16 %v386
        %v411 = vunpack.c.l.bf16 %v387
        %v412 = vunpack.c.h.bf16 %v387
        %v413 = vunpack.c.l.bf16 %v388
        %v414 = vunpack.c.h.bf16 %v388
        %v415 = vunpack.c.l.bf16 %v389
        %v416 = vunpack.c.h.bf16 %v389
        %v417 = vunpack.c.l.bf16 %v390
        %v418 = vunpack.c.h.bf16 %v390
        %v419 = vunpack.c.l.bf16 %v391
        %v420 = vunpack.c.h.bf16 %v391
        %v421 = vunpack.c.l.bf16 %v392
        %v422 = vunpack.c.h.bf16 %v392
        %v423 = vunpack.c.l.bf16 %v393
        %v424 = vunpack.c.h.bf16 %v393
        %v425 = vunpack.c.l.bf16 %v394
        %v426 = vunpack.c.h.bf16 %v394
        %v427 = vld [vmem:[%s363] sm:$0xff]
        %v428 = vld [vmem:[%s363 + $0x8] sm:$0xff]
        %v429 = vld [vmem:[%s363 + $0x10] sm:$0xff]
        %v430 = vld [vmem:[%s363 + $0x18] sm:$0xff]
        %v431 = vld [vmem:[%s363 + $0x20] sm:$0xff]
        %v432 = vld [vmem:[%s363 + $0x28] sm:$0xff]
        %v433 = vld [vmem:[%s363 + $0x30] sm:$0xff]
        %v434 = vld [vmem:[%s363 + $0x38] sm:$0xff]
        %v435 = vld [vmem:[%s363 + $0x40] sm:$0xff]
        %v436 = vld [vmem:[%s363 + $0x48] sm:$0xff]
        %v437 = vld [vmem:[%s363 + $0x50] sm:$0xff]
        %v438 = vld [vmem:[%s363 + $0x58] sm:$0xff]
        %v439 = vld [vmem:[%s363 + $0x60] sm:$0xff]
        %v440 = vld [vmem:[%s363 + $0x68] sm:$0xff]
        %v441 = vld [vmem:[%s363 + $0x70] sm:$0xff]
        %v442 = vld [vmem:[%s363 + $0x78] sm:$0xff]
        %v443 = vld [vmem:[%s2] sm:$0x1]
        %v445 = vlaneseq
        %v446 = vshrl.u32 %v445, 7
        %v447 = vsub.s32 0, %v446
        %v448 = vrot.slane %v443, %v447
        %v450 = vmul.f32 %v427, %v448
        %v451 = vmul.f32 %v428, %v448
        %v452 = vmul.f32 %v429, %v448
        %v453 = vmul.f32 %v430, %v448
        %v454 = vmul.f32 %v431, %v448
        %v455 = vmul.f32 %v432, %v448
        %v456 = vmul.f32 %v433, %v448
        %v457 = vmul.f32 %v434, %v448
        %v458 = vmul.f32 %v435, %v448
        %v459 = vmul.f32 %v436, %v448
        %v460 = vmul.f32 %v437, %v448
        %v461 = vmul.f32 %v438, %v448
        %v462 = vmul.f32 %v439, %v448
        %v463 = vmul.f32 %v440, %v448
        %v464 = vmul.f32 %v441, %v448
        %v465 = vmul.f32 %v442, %v448
        %vm466 = vcmask 64512
        %v467 = vsel %vm466, %v450, 0.0
        %468 = vadd.xlane.f32.xlu0 %v467
        %v469 = vpop.xlane.xlu0 %468
        %v470 = vsel %vm466, %v451, 0.0
        %471 = vadd.xlane.f32.xlu0 %v470
        %v472 = vpop.xlane.xlu0 %471
        %v473 = vsel %vm466, %v452, 0.0
        %474 = vadd.xlane.f32.xlu0 %v473
        %v475 = vpop.xlane.xlu0 %474
        %v476 = vsel %vm466, %v453, 0.0
        %477 = vadd.xlane.f32.xlu0 %v476
        %v478 = vpop.xlane.xlu0 %477
        %v479 = vsel %vm466, %v454, 0.0
        %480 = vadd.xlane.f32.xlu0 %v479
        %v481 = vpop.xlane.xlu0 %480
        %v482 = vsel %vm466, %v455, 0.0
        %483 = vadd.xlane.f32.xlu0 %v482
        %v484 = vpop.xlane.xlu0 %483
        %v485 = vsel %vm466, %v456, 0.0
        %486 = vadd.xlane.f32.xlu0 %v485
        %v487 = vpop.xlane.xlu0 %486
        %v488 = vsel %vm466, %v457, 0.0
        %489 = vadd.xlane.f32.xlu0 %v488
        %v490 = vpop.xlane.xlu0 %489
        %v491 = vsel %vm466, %v458, 0.0
        %492 = vadd.xlane.f32.xlu0 %v491
        %v493 = vpop.xlane.xlu0 %492
        %v494 = vsel %vm466, %v459, 0.0
        %495 = vadd.xlane.f32.xlu0 %v494
        %v496 = vpop.xlane.xlu0 %495
        %v497 = vsel %vm466, %v460, 0.0
        %498 = vadd.xlane.f32.xlu0 %v497
        %v499 = vpop.xlane.xlu0 %498
        %v500 = vsel %vm466, %v461, 0.0
        %501 = vadd.xlane.f32.xlu0 %v500
        %v502 = vpop.xlane.xlu0 %501
        %v503 = vsel %vm466, %v462, 0.0
        %504 = vadd.xlane.f32.xlu0 %v503
        %v505 = vpop.xlane.xlu0 %504
        %v506 = vsel %vm466, %v463, 0.0
        %507 = vadd.xlane.f32.xlu0 %v506
        %v508 = vpop.xlane.xlu0 %507
        %v509 = vsel %vm466, %v464, 0.0
        %510 = vadd.xlane.f32.xlu0 %v509
        %v511 = vpop.xlane.xlu0 %510
        %v512 = vsel %vm466, %v465, 0.0
        %513 = vadd.xlane.f32.xlu0 %v512
        %v514 = vpop.xlane.xlu0 %513
        %v515 = vld [vmem:[#allocation2] sm:$0x1]
        %v517 = vlaneseq
        %v518 = vshrl.u32 %v517, 7
        %v519 = vsub.s32 0, %v518
        %v520 = vrot.slane %v515, %v519
        %v522 = vadd.f32 %v469, %v520
        %v523 = vadd.f32 %v472, %v520
        %v524 = vadd.f32 %v475, %v520
        %v525 = vadd.f32 %v478, %v520
        %v526 = vadd.f32 %v481, %v520
        %v527 = vadd.f32 %v484, %v520
        %v528 = vadd.f32 %v487, %v520
        %v529 = vadd.f32 %v490, %v520
        %v530 = vadd.f32 %v493, %v520
        %v531 = vadd.f32 %v496, %v520
        %v532 = vadd.f32 %v499, %v520
        %v533 = vadd.f32 %v502, %v520
        %v534 = vadd.f32 %v505, %v520
        %v535 = vadd.f32 %v508, %v520
        %v536 = vadd.f32 %v511, %v520
        %v537 = vadd.f32 %v514, %v520
        %v538 = vld [vmem:[%s7] sm:$0xf]
        %v539 = vld [vmem:[%s7 + $0x4] sm:$0xf]
        %v540 = vld [vmem:[%s7 + $0x8] sm:$0xf]
        %v541 = vld [vmem:[%s7 + $0xc] sm:$0xf]
        %v542 = vld [vmem:[%s7 + $0x10] sm:$0xf]
        %v543 = vld [vmem:[%s7 + $0x14] sm:$0xf]
        %v544 = vld [vmem:[%s7 + $0x18] sm:$0xf]
        %v545 = vld [vmem:[%s7 + $0x1c] sm:$0xf]
        %v546 = vld [vmem:[%s7 + $0x20] sm:$0xf]
        %v547 = vld [vmem:[%s7 + $0x24] sm:$0xf]
        %v548 = vld [vmem:[%s7 + $0x28] sm:$0xf]
        %v549 = vld [vmem:[%s7 + $0x2c] sm:$0xf]
        %v550 = vld [vmem:[%s7 + $0x30] sm:$0xf]
        %v551 = vld [vmem:[%s7 + $0x34] sm:$0xf]
        %v552 = vld [vmem:[%s7 + $0x38] sm:$0xf]
        %v553 = vld [vmem:[%s7 + $0x3c] sm:$0xf]
        %v554 = vld [vmem:[%s7 + $0x40] sm:$0xf]
        %v555 = vld [vmem:[%s7 + $0x44] sm:$0xf]
        %v556 = vld [vmem:[%s7 + $0x48] sm:$0xf]
        %v557 = vld [vmem:[%s7 + $0x4c] sm:$0xf]
        %v558 = vld [vmem:[%s7 + $0x50] sm:$0xf]
        %v559 = vld [vmem:[%s7 + $0x54] sm:$0xf]
        %v560 = vld [vmem:[%s7 + $0x58] sm:$0xf]
        %v561 = vld [vmem:[%s7 + $0x5c] sm:$0xf]
        %v562 = vld [vmem:[%s7 + $0x60] sm:$0xf]
        %v563 = vld [vmem:[%s7 + $0x64] sm:$0xf]
        %v564 = vld [vmem:[%s7 + $0x68] sm:$0xf]
        %v565 = vld [vmem:[%s7 + $0x6c] sm:$0xf]
        %v566 = vld [vmem:[%s7 + $0x70] sm:$0xf]
        %v567 = vld [vmem:[%s7 + $0x74] sm:$0xf]
        %v568 = vld [vmem:[%s7 + $0x78] sm:$0xf]
        %v569 = vld [vmem:[%s7 + $0x7c] sm:$0xf]
        %v586 = vunpack.c.l.b16 %v379
        %v587 = vunpack.c.h.b16 %v379
        %v588 = vunpack.c.l.b16 %v380
        %v589 = vunpack.c.h.b16 %v380
        %v590 = vunpack.c.l.b16 %v381
        %v591 = vunpack.c.h.b16 %v381
        %v592 = vunpack.c.l.b16 %v382
        %v593 = vunpack.c.h.b16 %v382
        %v594 = vunpack.c.l.b16 %v383
        %v595 = vunpack.c.h.b16 %v383
        %v596 = vunpack.c.l.b16 %v384
        %v597 = vunpack.c.h.b16 %v384
        %v598 = vunpack.c.l.b16 %v385
        %v599 = vunpack.c.h.b16 %v385
        %v600 = vunpack.c.l.b16 %v386
        %v601 = vunpack.c.h.b16 %v386
        %v602 = vunpack.c.l.b16 %v387
        %v603 = vunpack.c.h.b16 %v387
        %v604 = vunpack.c.l.b16 %v388
        %v605 = vunpack.c.h.b16 %v388
        %v606 = vunpack.c.l.b16 %v389
        %v607 = vunpack.c.h.b16 %v389
        %v608 = vunpack.c.l.b16 %v390
        %v609 = vunpack.c.h.b16 %v390
        %v610 = vunpack.c.l.b16 %v391
        %v611 = vunpack.c.h.b16 %v391
        %v612 = vunpack.c.l.b16 %v392
        %v613 = vunpack.c.h.b16 %v392
        %v614 = vunpack.c.l.b16 %v393
        %v615 = vunpack.c.h.b16 %v393
        %v616 = vunpack.c.l.b16 %v394
        %v617 = vunpack.c.h.b16 %v394
        %v618 = vpack.c.b16 %v588, %v586
        %v619 = vpack.c.b16 %v589, %v587
        %v620 = vpack.c.b16 %v592, %v590
        %v621 = vpack.c.b16 %v593, %v591
        %v622 = vpack.c.b16 %v596, %v594
        %v623 = vpack.c.b16 %v597, %v595
        %v624 = vpack.c.b16 %v600, %v598
        %v625 = vpack.c.b16 %v601, %v599
        %v626 = vpack.c.b16 %v604, %v602
        %v627 = vpack.c.b16 %v605, %v603
        %v628 = vpack.c.b16 %v608, %v606
        %v629 = vpack.c.b16 %v609, %v607
        %v630 = vpack.c.b16 %v612, %v610
        %v631 = vpack.c.b16 %v613, %v611
        %v632 = vpack.c.b16 %v616, %v614
        %v633 = vpack.c.b16 %v617, %v615
        %v682 = vunpack.c.l.b16 %v538
        %v683 = vunpack.c.l.b16 %v539
        %v684 = vunpack.c.l.b16 %v540
        %v685 = vunpack.c.l.b16 %v541
        %v686 = vunpack.c.l.b16 %v542
        %v687 = vunpack.c.l.b16 %v543
        %v688 = vunpack.c.l.b16 %v544
        %v689 = vunpack.c.l.b16 %v545
        %v690 = vunpack.c.l.b16 %v546
        %v691 = vunpack.c.l.b16 %v547
        %v692 = vunpack.c.l.b16 %v548
        %v693 = vunpack.c.l.b16 %v549
        %v694 = vunpack.c.l.b16 %v550
        %v695 = vunpack.c.l.b16 %v551
        %v696 = vunpack.c.l.b16 %v552
        %v697 = vunpack.c.l.b16 %v553
        %v698 = vunpack.c.l.b16 %v554
        %v699 = vunpack.c.l.b16 %v555
        %v700 = vunpack.c.l.b16 %v556
        %v701 = vunpack.c.l.b16 %v557
        %v702 = vunpack.c.l.b16 %v558
        %v703 = vunpack.c.l.b16 %v559
        %v704 = vunpack.c.l.b16 %v560
        %v705 = vunpack.c.l.b16 %v561
        %v706 = vunpack.c.l.b16 %v562
        %v707 = vunpack.c.l.b16 %v563
        %v708 = vunpack.c.l.b16 %v564
        %v709 = vunpack.c.l.b16 %v565
        %v710 = vunpack.c.l.b16 %v566
        %v711 = vunpack.c.l.b16 %v567
        %v712 = vunpack.c.l.b16 %v568
        %v713 = vunpack.c.l.b16 %v569
        %v714 = vpack.c.b16 %v683, %v682
        %v715 = vpack.c.b16 %v685, %v684
        %v716 = vpack.c.b16 %v687, %v686
        %v717 = vpack.c.b16 %v689, %v688
        %v718 = vpack.c.b16 %v691, %v690
        %v719 = vpack.c.b16 %v693, %v692
        %v720 = vpack.c.b16 %v695, %v694
        %v721 = vpack.c.b16 %v697, %v696
        %v722 = vpack.c.b16 %v699, %v698
        %v723 = vpack.c.b16 %v701, %v700
        %v724 = vpack.c.b16 %v703, %v702
        %v725 = vpack.c.b16 %v705, %v704
        %v726 = vpack.c.b16 %v707, %v706
        %v727 = vpack.c.b16 %v709, %v708
        %v728 = vpack.c.b16 %v711, %v710
        %v729 = vpack.c.b16 %v713, %v712
        %746 = vmatprep.subr.bf16.mxu0 0
        %747 = vmatpush1.bf16.msra.mxu0 %v721
        %748 = vmatprep.subr.bf16.mxu0 0
        %749 = vmatpush1.bf16.msra.mxu0 %v720
        %750 = vmatprep.subr.bf16.mxu0 0
        %751 = vmatpush1.bf16.msra.mxu0 %v719
        %752 = vmatprep.subr.bf16.mxu0 0
        %753 = vmatpush1.bf16.msra.mxu0 %v718
        %754 = vmatprep.subr.bf16.mxu0 0
        %755 = vmatpush1.bf16.msra.mxu0 %v717
        %756 = vmatprep.subr.bf16.mxu0 0
        %757 = vmatpush1.bf16.msra.mxu0 %v716
        %758 = vmatprep.subr.bf16.mxu0 0
        %759 = vmatpush1.bf16.msra.mxu0 %v715
        %760 = vmatprep.subr.bf16.mxu0 0
        %761 = vmatpush1.bf16.msra.mxu0 %v714
        %762 = vmatprep.subr.bf16.mxu0 0
        %763 = vmatpush2.bf16.msra.mxu0 %v729
        %764 = vmatprep.subr.bf16.mxu0 0
        %765 = vmatpush2.bf16.msra.mxu0 %v728
        %766 = vmatprep.subr.bf16.mxu0 0
        %767 = vmatpush2.bf16.msra.mxu0 %v727
        %768 = vmatprep.subr.bf16.mxu0 0
        %769 = vmatpush2.bf16.msra.mxu0 %v726
        %770 = vmatprep.subr.bf16.mxu0 0
        %771 = vmatpush2.bf16.msra.mxu0 %v725
        %772 = vmatprep.subr.bf16.mxu0 0
        %773 = vmatpush2.bf16.msra.mxu0 %v724
        %774 = vmatprep.subr.bf16.mxu0 0
        %775 = vmatpush2.bf16.msra.mxu0 %v723
        %776 = vmatprep.subr.bf16.mxu0 0
        %777 = vmatpush2.bf16.msra.mxu0 %v722
        %778 = vmatprep.mubr.bf16.mxu0 %v619
        %779 = vmatmul.mubr.bf16.gmra.mxu0 %v618
        %v780 = vpop.f32.mrf.mxu0
        %v781 = vadd.f32 0.0, %v780
        %v782 = vpop.f32.mrf.mxu0
        %v783 = vpop.f32.mrf.mxu0
        %v784 = vadd.f32 0.0, %v783
        %v785 = vpop.f32.mrf.mxu0
        %786 = vmatprep.mubr.bf16.mxu0 %v621
        %787 = vmatmul.mubr.bf16.gmra.mxu0 %v620
        %v788 = vpop.f32.mrf.mxu0
        %v789 = vadd.f32 0.0, %v788
        %v790 = vpop.f32.mrf.mxu0
        %v791 = vpop.f32.mrf.mxu0
        %v792 = vadd.f32 0.0, %v791
        %v793 = vpop.f32.mrf.mxu0
        %794 = vmatprep.mubr.bf16.mxu0 %v623
        %795 = vmatmul.mubr.bf16.gmra.mxu0 %v622
        %v796 = vpop.f32.mrf.mxu0
        %v797 = vadd.f32 0.0, %v796
        %v798 = vpop.f32.mrf.mxu0
        %v799 = vpop.f32.mrf.mxu0
        %v800 = vadd.f32 0.0, %v799
        %v801 = vpop.f32.mrf.mxu0
        %802 = vmatprep.mubr.bf16.mxu0 %v625
        %803 = vmatmul.mubr.bf16.gmra.mxu0 %v624
        %v804 = vpop.f32.mrf.mxu0
        %v805 = vadd.f32 0.0, %v804
        %v806 = vpop.f32.mrf.mxu0
        %v807 = vpop.f32.mrf.mxu0
        %v808 = vadd.f32 0.0, %v807
        %v809 = vpop.f32.mrf.mxu0
        %810 = vmatprep.mubr.bf16.mxu0 %v627
        %811 = vmatmul.mubr.bf16.gmra.mxu0 %v626
        %v812 = vpop.f32.mrf.mxu0
        %v813 = vadd.f32 0.0, %v812
        %v814 = vpop.f32.mrf.mxu0
        %v815 = vpop.f32.mrf.mxu0
        %v816 = vadd.f32 0.0, %v815
        %v817 = vpop.f32.mrf.mxu0
        %818 = vmatprep.mubr.bf16.mxu0 %v629
        %819 = vmatmul.mubr.bf16.gmra.mxu0 %v628
        %v820 = vpop.f32.mrf.mxu0
        %v821 = vadd.f32 0.0, %v820
        %v822 = vpop.f32.mrf.mxu0
        %v823 = vpop.f32.mrf.mxu0
        %v824 = vadd.f32 0.0, %v823
        %v825 = vpop.f32.mrf.mxu0
        %826 = vmatprep.mubr.bf16.mxu0 %v631
        %827 = vmatmul.mubr.bf16.gmra.mxu0 %v630
        %v828 = vpop.f32.mrf.mxu0
        %v829 = vadd.f32 0.0, %v828
        %v830 = vpop.f32.mrf.mxu0
        %v831 = vpop.f32.mrf.mxu0
        %v832 = vadd.f32 0.0, %v831
        %v833 = vpop.f32.mrf.mxu0
        %834 = vmatprep.mubr.bf16.mxu0 %v633
        %835 = vmatmul.mubr.bf16.gmra.mxu0 %v632
        %v836 = vpop.f32.mrf.mxu0
        %v837 = vadd.f32 0.0, %v836
        %v838 = vpop.f32.mrf.mxu0
        %v839 = vpop.f32.mrf.mxu0
        %v840 = vadd.f32 0.0, %v839
        %v841 = vpop.f32.mrf.mxu0
        %842 = vdwg.mxu0
        %v843 = vmul.f32 %v395, %v395
        %v844 = vmul.f32 %v396, %v396
        %v845 = vmul.f32 %v397, %v397
        %v846 = vmul.f32 %v398, %v398
        %v847 = vmul.f32 %v399, %v399
        %v848 = vmul.f32 %v400, %v400
        %v849 = vmul.f32 %v401, %v401
        %v850 = vmul.f32 %v402, %v402
        %v851 = vmul.f32 %v403, %v403
        %v852 = vmul.f32 %v404, %v404
        %v853 = vmul.f32 %v405, %v405
        %v854 = vmul.f32 %v406, %v406
        %v855 = vmul.f32 %v407, %v407
        %v856 = vmul.f32 %v408, %v408
        %v857 = vmul.f32 %v409, %v409
        %v858 = vmul.f32 %v410, %v410
        %v859 = vmul.f32 %v411, %v411
        %v860 = vmul.f32 %v412, %v412
        %v861 = vmul.f32 %v413, %v413
        %v862 = vmul.f32 %v414, %v414
        %v863 = vmul.f32 %v415, %v415
        %v864 = vmul.f32 %v416, %v416
        %v865 = vmul.f32 %v417, %v417
        %v866 = vmul.f32 %v418, %v418
        %v867 = vmul.f32 %v419, %v419
        %v868 = vmul.f32 %v420, %v420
        %v869 = vmul.f32 %v421, %v421
        %v870 = vmul.f32 %v422, %v422
        %v871 = vmul.f32 %v423, %v423
        %v872 = vmul.f32 %v424, %v424
        %v873 = vmul.f32 %v425, %v425
        %v874 = vmul.f32 %v426, %v426
        %v875 = vadd.f32 %v843, %v844
        %876 = vadd.xlane.f32.xlu0 %v875
        %v877 = vpop.xlane.xlu0 %876
        %v878 = vadd.f32 %v845, %v846
        %879 = vadd.xlane.f32.xlu0 %v878
        %v880 = vpop.xlane.xlu0 %879
        %v881 = vadd.f32 %v847, %v848
        %882 = vadd.xlane.f32.xlu0 %v881
        %v883 = vpop.xlane.xlu0 %882
        %v884 = vadd.f32 %v849, %v850
        %885 = vadd.xlane.f32.xlu0 %v884
        %v886 = vpop.xlane.xlu0 %885
        %v887 = vadd.f32 %v851, %v852
        %888 = vadd.xlane.f32.xlu0 %v887
        %v889 = vpop.xlane.xlu0 %888
        %v890 = vadd.f32 %v853, %v854
        %891 = vadd.xlane.f32.xlu0 %v890
        %v892 = vpop.xlane.xlu0 %891
        %v893 = vadd.f32 %v855, %v856
        %894 = vadd.xlane.f32.xlu0 %v893
        %v895 = vpop.xlane.xlu0 %894
        %v896 = vadd.f32 %v857, %v858
        %897 = vadd.xlane.f32.xlu0 %v896
        %v898 = vpop.xlane.xlu0 %897
        %v899 = vadd.f32 %v859, %v860
        %900 = vadd.xlane.f32.xlu0 %v899
        %v901 = vpop.xlane.xlu0 %900
        %v902 = vadd.f32 %v861, %v862
        %903 = vadd.xlane.f32.xlu0 %v902
        %v904 = vpop.xlane.xlu0 %903
        %v905 = vadd.f32 %v863, %v864
        %906 = vadd.xlane.f32.xlu0 %v905
        %v907 = vpop.xlane.xlu0 %906
        %v908 = vadd.f32 %v865, %v866
        %909 = vadd.xlane.f32.xlu0 %v908
        %v910 = vpop.xlane.xlu0 %909
        %v911 = vadd.f32 %v867, %v868
        %912 = vadd.xlane.f32.xlu0 %v911
        %v913 = vpop.xlane.xlu0 %912
        %v914 = vadd.f32 %v869, %v870
        %915 = vadd.xlane.f32.xlu0 %v914
        %v916 = vpop.xlane.xlu0 %915
        %v917 = vadd.f32 %v871, %v872
        %918 = vadd.xlane.f32.xlu0 %v917
        %v919 = vpop.xlane.xlu0 %918
        %v920 = vadd.f32 %v873, %v874
        %921 = vadd.xlane.f32.xlu0 %v920
        %v922 = vpop.xlane.xlu0 %921
        %v923 = vmul.f32 %v781, %v781
        %v924 = vmul.f32 %v784, %v784
        %v925 = vmul.f32 %v789, %v789
        %v926 = vmul.f32 %v792, %v792
        %v927 = vmul.f32 %v797, %v797
        %v928 = vmul.f32 %v800, %v800
        %v929 = vmul.f32 %v805, %v805
        %v930 = vmul.f32 %v808, %v808
        %v931 = vmul.f32 %v813, %v813
        %v932 = vmul.f32 %v816, %v816
        %v933 = vmul.f32 %v821, %v821
        %v934 = vmul.f32 %v824, %v824
        %v935 = vmul.f32 %v829, %v829
        %v936 = vmul.f32 %v832, %v832
        %v937 = vmul.f32 %v837, %v837
        %v938 = vmul.f32 %v840, %v840
        %vm939 = vcmask 130048
        %v940 = vsel %vm939, %v923, 0.0
        %941 = vadd.xlane.f32.xlu0 %v940
        %v942 = vpop.xlane.xlu0 %941
        %v943 = vsel %vm939, %v924, 0.0
        %944 = vadd.xlane.f32.xlu0 %v943
        %v945 = vpop.xlane.xlu0 %944
        %v946 = vsel %vm939, %v925, 0.0
        %947 = vadd.xlane.f32.xlu0 %v946
        %v948 = vpop.xlane.xlu0 %947
        %v949 = vsel %vm939, %v926, 0.0
        %950 = vadd.xlane.f32.xlu0 %v949
        %v951 = vpop.xlane.xlu0 %950
        %v952 = vsel %vm939, %v927, 0.0
        %953 = vadd.xlane.f32.xlu0 %v952
        %v954 = vpop.xlane.xlu0 %953
        %v955 = vsel %vm939, %v928, 0.0
        %956 = vadd.xlane.f32.xlu0 %v955
        %v957 = vpop.xlane.xlu0 %956
        %v958 = vsel %vm939, %v929, 0.0
        %959 = vadd.xlane.f32.xlu0 %v958
        %v960 = vpop.xlane.xlu0 %959
        %v961 = vsel %vm939, %v930, 0.0
        %962 = vadd.xlane.f32.xlu0 %v961
        %v963 = vpop.xlane.xlu0 %962
        %v964 = vsel %vm939, %v931, 0.0
        %965 = vadd.xlane.f32.xlu0 %v964
        %v966 = vpop.xlane.xlu0 %965
        %v967 = vsel %vm939, %v932, 0.0
        %968 = vadd.xlane.f32.xlu0 %v967
        %v969 = vpop.xlane.xlu0 %968
        %v970 = vsel %vm939, %v933, 0.0
        %971 = vadd.xlane.f32.xlu0 %v970
        %v972 = vpop.xlane.xlu0 %971
        %v973 = vsel %vm939, %v934, 0.0
        %974 = vadd.xlane.f32.xlu0 %v973
        %v975 = vpop.xlane.xlu0 %974
        %v976 = vsel %vm939, %v935, 0.0
        %977 = vadd.xlane.f32.xlu0 %v976
        %v978 = vpop.xlane.xlu0 %977
        %v979 = vsel %vm939, %v936, 0.0
        %980 = vadd.xlane.f32.xlu0 %v979
        %v981 = vpop.xlane.xlu0 %980
        %v982 = vsel %vm939, %v937, 0.0
        %983 = vadd.xlane.f32.xlu0 %v982
        %v984 = vpop.xlane.xlu0 %983
        %v985 = vsel %vm939, %v938, 0.0
        %986 = vadd.xlane.f32.xlu0 %v985
        %v987 = vpop.xlane.xlu0 %986
        %v988 = vsub.f32 %v942, %v877
        %v989 = vsub.f32 %v945, %v880
        %v990 = vsub.f32 %v948, %v883
        %v991 = vsub.f32 %v951, %v886
        %v992 = vsub.f32 %v954, %v889
        %v993 = vsub.f32 %v957, %v892
        %v994 = vsub.f32 %v960, %v895
        %v995 = vsub.f32 %v963, %v898
        %v996 = vsub.f32 %v966, %v901
        %v997 = vsub.f32 %v969, %v904
        %v998 = vsub.f32 %v972, %v907
        %v999 = vsub.f32 %v975, %v910
        %v1000 = vsub.f32 %v978, %v913
        %v1001 = vsub.f32 %v981, %v916
        %v1002 = vsub.f32 %v984, %v919
        %v1003 = vsub.f32 %v987, %v922
        %v1004 = vmul.f32 %v988, 0.5
        %v1005 = vmul.f32 %v989, 0.5
        %v1006 = vmul.f32 %v990, 0.5
        %v1007 = vmul.f32 %v991, 0.5
        %v1008 = vmul.f32 %v992, 0.5
        %v1009 = vmul.f32 %v993, 0.5
        %v1010 = vmul.f32 %v994, 0.5
        %v1011 = vmul.f32 %v995, 0.5
        %v1012 = vmul.f32 %v996, 0.5
        %v1013 = vmul.f32 %v997, 0.5
        %v1014 = vmul.f32 %v998, 0.5
        %v1015 = vmul.f32 %v999, 0.5
        %v1016 = vmul.f32 %v1000, 0.5
        %v1017 = vmul.f32 %v1001, 0.5
        %v1018 = vmul.f32 %v1002, 0.5
        %v1019 = vmul.f32 %v1003, 0.5
        %v1020 = vadd.f32 %v522, %v1004
        %v1021 = vadd.f32 %v523, %v1005
        %v1022 = vadd.f32 %v524, %v1006
        %v1023 = vadd.f32 %v525, %v1007
        %v1024 = vadd.f32 %v526, %v1008
        %v1025 = vadd.f32 %v527, %v1009
        %v1026 = vadd.f32 %v528, %v1010
        %v1027 = vadd.f32 %v529, %v1011
        %v1028 = vadd.f32 %v530, %v1012
        %v1029 = vadd.f32 %v531, %v1013
        %v1030 = vadd.f32 %v532, %v1014
        %v1031 = vadd.f32 %v533, %v1015
        %v1032 = vadd.f32 %v534, %v1016
        %v1033 = vadd.f32 %v535, %v1017
        %v1034 = vadd.f32 %v536, %v1018
        %v1035 = vadd.f32 %v537, %v1019
        %v1036 = vld [vmem:[%s4] sm:$0xff]
        %v1037 = vld [vmem:[%s4 + $0x8] sm:$0xff]
        %v1038 = vld [vmem:[%s4 + $0x10] sm:$0xff]
        %v1039 = vld [vmem:[%s4 + $0x18] sm:$0xff]
        %v1040 = vld [vmem:[%s4 + $0x20] sm:$0xff]
        %v1041 = vld [vmem:[%s4 + $0x28] sm:$0xff]
        %v1042 = vld [vmem:[%s4 + $0x30] sm:$0xff]
        %v1043 = vld [vmem:[%s4 + $0x38] sm:$0xff]
        %v1044 = vld [vmem:[%s4 + $0x40] sm:$0xff]
        %v1045 = vld [vmem:[%s4 + $0x48] sm:$0xff]
        %v1046 = vld [vmem:[%s4 + $0x50] sm:$0xff]
        %v1047 = vld [vmem:[%s4 + $0x58] sm:$0xff]
        %v1048 = vld [vmem:[%s4 + $0x60] sm:$0xff]
        %v1049 = vld [vmem:[%s4 + $0x68] sm:$0xff]
        %v1050 = vld [vmem:[%s4 + $0x70] sm:$0xff]
        %v1051 = vld [vmem:[%s4 + $0x78] sm:$0xff]
        %v1052 = vld [vmem:[%s4 + $0x80] sm:$0xff]
        %v1053 = vld [vmem:[%s4 + $0x88] sm:$0xff]
        %v1054 = vld [vmem:[%s4 + $0x90] sm:$0xff]
        %v1055 = vld [vmem:[%s4 + $0x98] sm:$0xff]
        %v1056 = vld [vmem:[%s4 + $0xa0] sm:$0xff]
        %v1057 = vld [vmem:[%s4 + $0xa8] sm:$0xff]
        %v1058 = vld [vmem:[%s4 + $0xb0] sm:$0xff]
        %v1059 = vld [vmem:[%s4 + $0xb8] sm:$0xff]
        %v1060 = vld [vmem:[%s4 + $0xc0] sm:$0xff]
        %v1061 = vld [vmem:[%s4 + $0xc8] sm:$0xff]
        %v1062 = vld [vmem:[%s4 + $0xd0] sm:$0xff]
        %v1063 = vld [vmem:[%s4 + $0xd8] sm:$0xff]
        %v1064 = vld [vmem:[%s4 + $0xe0] sm:$0xff]
        %v1065 = vld [vmem:[%s4 + $0xe8] sm:$0xff]
        %v1066 = vld [vmem:[%s4 + $0xf0] sm:$0xff]
        %v1067 = vld [vmem:[%s4 + $0xf8] sm:$0xff]
        %v1068 = vld [vmem:[%s6] sm:$0x3]
        %v1070 = vlaneseq
        %v1071 = vshrl.u32 %v1070, 7
        %v1072 = vsub.s32 0, %v1071
        %v1073 = vrot.slane %v1068, %v1072
        %v1074 = vlaneseq
        %v1075 = vshrl.u32 %v1074, 7
        %v1076 = vsub.s32 1, %v1075
        %v1077 = vrot.slane %v1068, %v1076
        %v1112 = vunpack.c.l.b16 %v1036
        %v1113 = vunpack.c.h.b16 %v1036
        %v1114 = vunpack.c.l.b16 %v1037
        %v1115 = vunpack.c.h.b16 %v1037
        %v1116 = vunpack.c.l.b16 %v1038
        %v1117 = vunpack.c.h.b16 %v1038
        %v1118 = vunpack.c.l.b16 %v1039
        %v1119 = vunpack.c.h.b16 %v1039
        %v1120 = vunpack.c.l.b16 %v1040
        %v1121 = vunpack.c.h.b16 %v1040
        %v1122 = vunpack.c.l.b16 %v1041
        %v1123 = vunpack.c.h.b16 %v1041
        %v1124 = vunpack.c.l.b16 %v1042
        %v1125 = vunpack.c.h.b16 %v1042
        %v1126 = vunpack.c.l.b16 %v1043
        %v1127 = vunpack.c.h.b16 %v1043
        %v1128 = vunpack.c.l.b16 %v1044
        %v1129 = vunpack.c.h.b16 %v1044
        %v1130 = vunpack.c.l.b16 %v1045
        %v1131 = vunpack.c.h.b16 %v1045
        %v1132 = vunpack.c.l.b16 %v1046
        %v1133 = vunpack.c.h.b16 %v1046
        %v1134 = vunpack.c.l.b16 %v1047
        %v1135 = vunpack.c.h.b16 %v1047
        %v1136 = vunpack.c.l.b16 %v1048
        %v1137 = vunpack.c.h.b16 %v1048
        %v1138 = vunpack.c.l.b16 %v1049
        %v1139 = vunpack.c.h.b16 %v1049
        %v1140 = vunpack.c.l.b16 %v1050
        %v1141 = vunpack.c.h.b16 %v1050
        %v1142 = vunpack.c.l.b16 %v1051
        %v1143 = vunpack.c.h.b16 %v1051
        %v1144 = vunpack.c.l.b16 %v1052
        %v1145 = vunpack.c.h.b16 %v1052
        %v1146 = vunpack.c.l.b16 %v1053
        %v1147 = vunpack.c.h.b16 %v1053
        %v1148 = vunpack.c.l.b16 %v1054
        %v1149 = vunpack.c.h.b16 %v1054
        %v1150 = vunpack.c.l.b16 %v1055
        %v1151 = vunpack.c.h.b16 %v1055
        %v1152 = vunpack.c.l.b16 %v1056
        %v1153 = vunpack.c.h.b16 %v1056
        %v1154 = vunpack.c.l.b16 %v1057
        %v1155 = vunpack.c.h.b16 %v1057
        %v1156 = vunpack.c.l.b16 %v1058
        %v1157 = vunpack.c.h.b16 %v1058
        %v1158 = vunpack.c.l.b16 %v1059
        %v1159 = vunpack.c.h.b16 %v1059
        %v1160 = vunpack.c.l.b16 %v1060
        %v1161 = vunpack.c.h.b16 %v1060
        %v1162 = vunpack.c.l.b16 %v1061
        %v1163 = vunpack.c.h.b16 %v1061
        %v1164 = vunpack.c.l.b16 %v1062
        %v1165 = vunpack.c.h.b16 %v1062
        %v1166 = vunpack.c.l.b16 %v1063
        %v1167 = vunpack.c.h.b16 %v1063
        %v1168 = vunpack.c.l.b16 %v1064
        %v1169 = vunpack.c.h.b16 %v1064
        %v1170 = vunpack.c.l.b16 %v1065
        %v1171 = vunpack.c.h.b16 %v1065
        %v1172 = vunpack.c.l.b16 %v1066
        %v1173 = vunpack.c.h.b16 %v1066
        %v1174 = vunpack.c.l.b16 %v1067
        %v1175 = vunpack.c.h.b16 %v1067
        %v1176 = vpack.c.b16 %v1114, %v1112
        %v1177 = vpack.c.b16 %v1115, %v1113
        %v1178 = vpack.c.b16 %v1118, %v1116
        %v1179 = vpack.c.b16 %v1119, %v1117
        %v1180 = vpack.c.b16 %v1122, %v1120
        %v1181 = vpack.c.b16 %v1123, %v1121
        %v1182 = vpack.c.b16 %v1126, %v1124
        %v1183 = vpack.c.b16 %v1127, %v1125
        %v1184 = vpack.c.b16 %v1130, %v1128
        %v1185 = vpack.c.b16 %v1131, %v1129
        %v1186 = vpack.c.b16 %v1134, %v1132
        %v1187 = vpack.c.b16 %v1135, %v1133
        %v1188 = vpack.c.b16 %v1138, %v1136
        %v1189 = vpack.c.b16 %v1139, %v1137
        %v1190 = vpack.c.b16 %v1142, %v1140
        %v1191 = vpack.c.b16 %v1143, %v1141
        %v1192 = vpack.c.b16 %v1146, %v1144
        %v1193 = vpack.c.b16 %v1147, %v1145
        %v1194 = vpack.c.b16 %v1150, %v1148
        %v1195 = vpack.c.b16 %v1151, %v1149
        %v1196 = vpack.c.b16 %v1154, %v1152
        %v1197 = vpack.c.b16 %v1155, %v1153
        %v1198 = vpack.c.b16 %v1158, %v1156
        %v1199 = vpack.c.b16 %v1159, %v1157
        %v1200 = vpack.c.b16 %v1162, %v1160
        %v1201 = vpack.c.b16 %v1163, %v1161
        %v1202 = vpack.c.b16 %v1166, %v1164
        %v1203 = vpack.c.b16 %v1167, %v1165
        %v1204 = vpack.c.b16 %v1170, %v1168
        %v1205 = vpack.c.b16 %v1171, %v1169
        %v1206 = vpack.c.b16 %v1174, %v1172
        %v1207 = vpack.c.b16 %v1175, %v1173
        %1240 = vmatprep.subr.bf16.mxu0 %v1191
        %1241 = vmatpush1.bf16.msra.mxu0 %v1190
        %1242 = vmatprep.subr.bf16.mxu0 %v1189
        %1243 = vmatpush1.bf16.msra.mxu0 %v1188
        %1244 = vmatprep.subr.bf16.mxu0 %v1187
        %1245 = vmatpush1.bf16.msra.mxu0 %v1186
        %1246 = vmatprep.subr.bf16.mxu0 %v1185
        %1247 = vmatpush1.bf16.msra.mxu0 %v1184
        %1248 = vmatprep.subr.bf16.mxu0 %v1183
        %1249 = vmatpush1.bf16.msra.mxu0 %v1182
        %1250 = vmatprep.subr.bf16.mxu0 %v1181
        %1251 = vmatpush1.bf16.msra.mxu0 %v1180
        %1252 = vmatprep.subr.bf16.mxu0 %v1179
        %1253 = vmatpush1.bf16.msra.mxu0 %v1178
        %1254 = vmatprep.subr.bf16.mxu0 %v1177
        %1255 = vmatpush1.bf16.msra.mxu0 %v1176
        %1256 = vmatprep.subr.bf16.mxu0 %v1207
        %1257 = vmatpush2.bf16.msra.mxu0 %v1206
        %1258 = vmatprep.subr.bf16.mxu0 %v1205
        %1259 = vmatpush2.bf16.msra.mxu0 %v1204
        %1260 = vmatprep.subr.bf16.mxu0 %v1203
        %1261 = vmatpush2.bf16.msra.mxu0 %v1202
        %1262 = vmatprep.subr.bf16.mxu0 %v1201
        %1263 = vmatpush2.bf16.msra.mxu0 %v1200
        %1264 = vmatprep.subr.bf16.mxu0 %v1199
        %1265 = vmatpush2.bf16.msra.mxu0 %v1198
        %1266 = vmatprep.subr.bf16.mxu0 %v1197
        %1267 = vmatpush2.bf16.msra.mxu0 %v1196
        %1268 = vmatprep.subr.bf16.mxu0 %v1195
        %1269 = vmatpush2.bf16.msra.mxu0 %v1194
        %1270 = vmatprep.subr.bf16.mxu0 %v1193
        %1271 = vmatpush2.bf16.msra.mxu0 %v1192
        %1272 = vmatprep.mubr.bf16.mxu0 %v619
        %1273 = vmatmul.mubr.bf16.gmra.mxu0 %v618
        %v1274 = vpop.f32.mrf.mxu0
        %v1275 = vadd.f32 %v1073, %v1274
        %v1276 = vpop.f32.mrf.mxu0
        %v1277 = vadd.f32 %v1077, %v1276
        %v1278 = vpop.f32.mrf.mxu0
        %v1279 = vadd.f32 %v1073, %v1278
        %v1280 = vpop.f32.mrf.mxu0
        %v1281 = vadd.f32 %v1077, %v1280
        %1282 = vmatprep.mubr.bf16.mxu0 %v621
        %1283 = vmatmul.mubr.bf16.gmra.mxu0 %v620
        %v1284 = vpop.f32.mrf.mxu0
        %v1285 = vadd.f32 %v1073, %v1284
        %v1286 = vpop.f32.mrf.mxu0
        %v1287 = vadd.f32 %v1077, %v1286
        %v1288 = vpop.f32.mrf.mxu0
        %v1289 = vadd.f32 %v1073, %v1288
        %v1290 = vpop.f32.mrf.mxu0
        %v1291 = vadd.f32 %v1077, %v1290
        %1292 = vmatprep.mubr.bf16.mxu0 %v623
        %1293 = vmatmul.mubr.bf16.gmra.mxu0 %v622
        %v1294 = vpop.f32.mrf.mxu0
        %v1295 = vadd.f32 %v1073, %v1294
        %v1296 = vpop.f32.mrf.mxu0
        %v1297 = vadd.f32 %v1077, %v1296
        %v1298 = vpop.f32.mrf.mxu0
        %v1299 = vadd.f32 %v1073, %v1298
        %v1300 = vpop.f32.mrf.mxu0
        %v1301 = vadd.f32 %v1077, %v1300
        %1302 = vmatprep.mubr.bf16.mxu0 %v625
        %1303 = vmatmul.mubr.bf16.gmra.mxu0 %v624
        %v1304 = vpop.f32.mrf.mxu0
        %v1305 = vadd.f32 %v1073, %v1304
        %v1306 = vpop.f32.mrf.mxu0
        %v1307 = vadd.f32 %v1077, %v1306
        %v1308 = vpop.f32.mrf.mxu0
        %v1309 = vadd.f32 %v1073, %v1308
        %v1310 = vpop.f32.mrf.mxu0
        %v1311 = vadd.f32 %v1077, %v1310
        %1312 = vmatprep.mubr.bf16.mxu0 %v627
        %1313 = vmatmul.mubr.bf16.gmra.mxu0 %v626
        %v1314 = vpop.f32.mrf.mxu0
        %v1315 = vadd.f32 %v1073, %v1314
        %v1316 = vpop.f32.mrf.mxu0
        %v1317 = vadd.f32 %v1077, %v1316
        %v1318 = vpop.f32.mrf.mxu0
        %v1319 = vadd.f32 %v1073, %v1318
        %v1320 = vpop.f32.mrf.mxu0
        %v1321 = vadd.f32 %v1077, %v1320
        %1322 = vmatprep.mubr.bf16.mxu0 %v629
        %1323 = vmatmul.mubr.bf16.gmra.mxu0 %v628
        %v1324 = vpop.f32.mrf.mxu0
        %v1325 = vadd.f32 %v1073, %v1324
        %v1326 = vpop.f32.mrf.mxu0
        %v1327 = vadd.f32 %v1077, %v1326
        %v1328 = vpop.f32.mrf.mxu0
        %v1329 = vadd.f32 %v1073, %v1328
        %v1330 = vpop.f32.mrf.mxu0
        %v1331 = vadd.f32 %v1077, %v1330
        %1332 = vmatprep.mubr.bf16.mxu0 %v631
        %1333 = vmatmul.mubr.bf16.gmra.mxu0 %v630
        %v1334 = vpop.f32.mrf.mxu0
        %v1335 = vadd.f32 %v1073, %v1334
        %v1336 = vpop.f32.mrf.mxu0
        %v1337 = vadd.f32 %v1077, %v1336
        %v1338 = vpop.f32.mrf.mxu0
        %v1339 = vadd.f32 %v1073, %v1338
        %v1340 = vpop.f32.mrf.mxu0
        %v1341 = vadd.f32 %v1077, %v1340
        %1342 = vmatprep.mubr.bf16.mxu0 %v633
        %1343 = vmatmul.mubr.bf16.gmra.mxu0 %v632
        %v1344 = vpop.f32.mrf.mxu0
        %v1345 = vadd.f32 %v1073, %v1344
        %v1346 = vpop.f32.mrf.mxu0
        %v1347 = vadd.f32 %v1077, %v1346
        %v1348 = vpop.f32.mrf.mxu0
        %v1349 = vadd.f32 %v1073, %v1348
        %v1350 = vpop.f32.mrf.mxu0
        %v1351 = vadd.f32 %v1077, %v1350
        %1352 = vdwg.mxu0
        %v1353 = vmax.f32 %v1275, 0.0
        %v1354 = vmax.f32 %v1277, 0.0
        %v1355 = vmax.f32 %v1279, 0.0
        %v1356 = vmax.f32 %v1281, 0.0
        %v1357 = vmax.f32 %v1285, 0.0
        %v1358 = vmax.f32 %v1287, 0.0
        %v1359 = vmax.f32 %v1289, 0.0
        %v1360 = vmax.f32 %v1291, 0.0
        %v1361 = vmax.f32 %v1295, 0.0
        %v1362 = vmax.f32 %v1297, 0.0
        %v1363 = vmax.f32 %v1299, 0.0
        %v1364 = vmax.f32 %v1301, 0.0
        %v1365 = vmax.f32 %v1305, 0.0
        %v1366 = vmax.f32 %v1307, 0.0
        %v1367 = vmax.f32 %v1309, 0.0
        %v1368 = vmax.f32 %v1311, 0.0
        %v1369 = vmax.f32 %v1315, 0.0
        %v1370 = vmax.f32 %v1317, 0.0
        %v1371 = vmax.f32 %v1319, 0.0
        %v1372 = vmax.f32 %v1321, 0.0
        %v1373 = vmax.f32 %v1325, 0.0
        %v1374 = vmax.f32 %v1327, 0.0
        %v1375 = vmax.f32 %v1329, 0.0
        %v1376 = vmax.f32 %v1331, 0.0
        %v1377 = vmax.f32 %v1335, 0.0
        %v1378 = vmax.f32 %v1337, 0.0
        %v1379 = vmax.f32 %v1339, 0.0
        %v1380 = vmax.f32 %v1341, 0.0
        %v1381 = vmax.f32 %v1345, 0.0
        %v1382 = vmax.f32 %v1347, 0.0
        %v1383 = vmax.f32 %v1349, 0.0
        %v1384 = vmax.f32 %v1351, 0.0
        %v1385 = vpack.c.bf16 %v1355, %v1353
        %v1386 = vpack.c.bf16 %v1356, %v1354
        %v1387 = vpack.c.bf16 %v1359, %v1357
        %v1388 = vpack.c.bf16 %v1360, %v1358
        %v1389 = vpack.c.bf16 %v1363, %v1361
        %v1390 = vpack.c.bf16 %v1364, %v1362
        %v1391 = vpack.c.bf16 %v1367, %v1365
        %v1392 = vpack.c.bf16 %v1368, %v1366
        %v1393 = vpack.c.bf16 %v1371, %v1369
        %v1394 = vpack.c.bf16 %v1372, %v1370
        %v1395 = vpack.c.bf16 %v1375, %v1373
        %v1396 = vpack.c.bf16 %v1376, %v1374
        %v1397 = vpack.c.bf16 %v1379, %v1377
        %v1398 = vpack.c.bf16 %v1380, %v1378
        %v1399 = vpack.c.bf16 %v1383, %v1381
        %v1400 = vpack.c.bf16 %v1384, %v1382
        %v1401 = vld [vmem:[#allocation3] sm:$0xff]
        %v1402 = vld [vmem:[#allocation3 + $0x8] sm:$0xff]
        %v1403 = vld [vmem:[#allocation3 + $0x10] sm:$0xff]
        %v1404 = vld [vmem:[#allocation3 + $0x18] sm:$0xff]
        %v1405 = vld [vmem:[#allocation3 + $0x20] sm:$0xff]
        %v1406 = vld [vmem:[#allocation3 + $0x28] sm:$0xff]
        %v1407 = vld [vmem:[#allocation3 + $0x30] sm:$0xff]
        %v1408 = vld [vmem:[#allocation3 + $0x38] sm:$0xff]
        %v1409 = vld [vmem:[#allocation3 + $0x40] sm:$0xff]
        %v1410 = vld [vmem:[#allocation3 + $0x48] sm:$0xff]
        %v1411 = vld [vmem:[#allocation3 + $0x50] sm:$0xff]
        %v1412 = vld [vmem:[#allocation3 + $0x58] sm:$0xff]
        %v1413 = vld [vmem:[#allocation3 + $0x60] sm:$0xff]
        %v1414 = vld [vmem:[#allocation3 + $0x68] sm:$0xff]
        %v1415 = vld [vmem:[#allocation3 + $0x70] sm:$0xff]
        %v1416 = vld [vmem:[#allocation3 + $0x78] sm:$0xff]
        %v1417 = vld [vmem:[#allocation3 + $0x80] sm:$0xff]
        %v1418 = vld [vmem:[#allocation3 + $0x88] sm:$0xff]
        %v1419 = vld [vmem:[#allocation3 + $0x90] sm:$0xff]
        %v1420 = vld [vmem:[#allocation3 + $0x98] sm:$0xff]
        %v1421 = vld [vmem:[#allocation3 + $0xa0] sm:$0xff]
        %v1422 = vld [vmem:[#allocation3 + $0xa8] sm:$0xff]
        %v1423 = vld [vmem:[#allocation3 + $0xb0] sm:$0xff]
        %v1424 = vld [vmem:[#allocation3 + $0xb8] sm:$0xff]
        %v1425 = vld [vmem:[#allocation3 + $0xc0] sm:$0xff]
        %v1426 = vld [vmem:[#allocation3 + $0xc8] sm:$0xff]
        %v1427 = vld [vmem:[#allocation3 + $0xd0] sm:$0xff]
        %v1428 = vld [vmem:[#allocation3 + $0xd8] sm:$0xff]
        %v1429 = vld [vmem:[#allocation3 + $0xe0] sm:$0xff]
        %v1430 = vld [vmem:[#allocation3 + $0xe8] sm:$0xff]
        %v1431 = vld [vmem:[#allocation3 + $0xf0] sm:$0xff]
        %v1432 = vld [vmem:[#allocation3 + $0xf8] sm:$0xff]
        %v1433 = vld [vmem:[%s6 + $0x2] sm:$0x3]
        %v1435 = vlaneseq
        %v1436 = vshrl.u32 %v1435, 7
        %v1437 = vsub.s32 0, %v1436
        %v1438 = vrot.slane %v1433, %v1437
        %v1439 = vlaneseq
        %v1440 = vshrl.u32 %v1439, 7
        %v1441 = vsub.s32 1, %v1440
        %v1442 = vrot.slane %v1433, %v1441
        %v1477 = vunpack.c.l.b16 %v1401
        %v1478 = vunpack.c.h.b16 %v1401
        %v1479 = vunpack.c.l.b16 %v1402
        %v1480 = vunpack.c.h.b16 %v1402
        %v1481 = vunpack.c.l.b16 %v1403
        %v1482 = vunpack.c.h.b16 %v1403
        %v1483 = vunpack.c.l.b16 %v1404
        %v1484 = vunpack.c.h.b16 %v1404
        %v1485 = vunpack.c.l.b16 %v1405
        %v1486 = vunpack.c.h.b16 %v1405
        %v1487 = vunpack.c.l.b16 %v1406
        %v1488 = vunpack.c.h.b16 %v1406
        %v1489 = vunpack.c.l.b16 %v1407
        %v1490 = vunpack.c.h.b16 %v1407
        %v1491 = vunpack.c.l.b16 %v1408
        %v1492 = vunpack.c.h.b16 %v1408
        %v1493 = vunpack.c.l.b16 %v1409
        %v1494 = vunpack.c.h.b16 %v1409
        %v1495 = vunpack.c.l.b16 %v1410
        %v1496 = vunpack.c.h.b16 %v1410
        %v1497 = vunpack.c.l.b16 %v1411
        %v1498 = vunpack.c.h.b16 %v1411
        %v1499 = vunpack.c.l.b16 %v1412
        %v1500 = vunpack.c.h.b16 %v1412
        %v1501 = vunpack.c.l.b16 %v1413
        %v1502 = vunpack.c.h.b16 %v1413
        %v1503 = vunpack.c.l.b16 %v1414
        %v1504 = vunpack.c.h.b16 %v1414
        %v1505 = vunpack.c.l.b16 %v1415
        %v1506 = vunpack.c.h.b16 %v1415
        %v1507 = vunpack.c.l.b16 %v1416
        %v1508 = vunpack.c.h.b16 %v1416
        %v1509 = vunpack.c.l.b16 %v1417
        %v1510 = vunpack.c.h.b16 %v1417
        %v1511 = vunpack.c.l.b16 %v1418
        %v1512 = vunpack.c.h.b16 %v1418
        %v1513 = vunpack.c.l.b16 %v1419
        %v1514 = vunpack.c.h.b16 %v1419
        %v1515 = vunpack.c.l.b16 %v1420
        %v1516 = vunpack.c.h.b16 %v1420
        %v1517 = vunpack.c.l.b16 %v1421
        %v1518 = vunpack.c.h.b16 %v1421
        %v1519 = vunpack.c.l.b16 %v1422
        %v1520 = vunpack.c.h.b16 %v1422
        %v1521 = vunpack.c.l.b16 %v1423
        %v1522 = vunpack.c.h.b16 %v1423
        %v1523 = vunpack.c.l.b16 %v1424
        %v1524 = vunpack.c.h.b16 %v1424
        %v1525 = vunpack.c.l.b16 %v1425
        %v1526 = vunpack.c.h.b16 %v1425
        %v1527 = vunpack.c.l.b16 %v1426
        %v1528 = vunpack.c.h.b16 %v1426
        %v1529 = vunpack.c.l.b16 %v1427
        %v1530 = vunpack.c.h.b16 %v1427
        %v1531 = vunpack.c.l.b16 %v1428
        %v1532 = vunpack.c.h.b16 %v1428
        %v1533 = vunpack.c.l.b16 %v1429
        %v1534 = vunpack.c.h.b16 %v1429
        %v1535 = vunpack.c.l.b16 %v1430
        %v1536 = vunpack.c.h.b16 %v1430
        %v1537 = vunpack.c.l.b16 %v1431
        %v1538 = vunpack.c.h.b16 %v1431
        %v1539 = vunpack.c.l.b16 %v1432
        %v1540 = vunpack.c.h.b16 %v1432
        %v1541 = vpack.c.b16 %v1479, %v1477
        %v1542 = vpack.c.b16 %v1480, %v1478
        %v1543 = vpack.c.b16 %v1483, %v1481
        %v1544 = vpack.c.b16 %v1484, %v1482
        %v1545 = vpack.c.b16 %v1487, %v1485
        %v1546 = vpack.c.b16 %v1488, %v1486
        %v1547 = vpack.c.b16 %v1491, %v1489
        %v1548 = vpack.c.b16 %v1492, %v1490
        %v1549 = vpack.c.b16 %v1495, %v1493
        %v1550 = vpack.c.b16 %v1496, %v1494
        %v1551 = vpack.c.b16 %v1499, %v1497
        %v1552 = vpack.c.b16 %v1500, %v1498
        %v1553 = vpack.c.b16 %v1503, %v1501
        %v1554 = vpack.c.b16 %v1504, %v1502
        %v1555 = vpack.c.b16 %v1507, %v1505
        %v1556 = vpack.c.b16 %v1508, %v1506
        %v1557 = vpack.c.b16 %v1511, %v1509
        %v1558 = vpack.c.b16 %v1512, %v1510
        %v1559 = vpack.c.b16 %v1515, %v1513
        %v1560 = vpack.c.b16 %v1516, %v1514
        %v1561 = vpack.c.b16 %v1519, %v1517
        %v1562 = vpack.c.b16 %v1520, %v1518
        %v1563 = vpack.c.b16 %v1523, %v1521
        %v1564 = vpack.c.b16 %v1524, %v1522
        %v1565 = vpack.c.b16 %v1527, %v1525
        %v1566 = vpack.c.b16 %v1528, %v1526
        %v1567 = vpack.c.b16 %v1531, %v1529
        %v1568 = vpack.c.b16 %v1532, %v1530
        %v1569 = vpack.c.b16 %v1535, %v1533
        %v1570 = vpack.c.b16 %v1536, %v1534
        %v1571 = vpack.c.b16 %v1539, %v1537
        %v1572 = vpack.c.b16 %v1540, %v1538
        %1605 = vmatprep.subr.bf16.mxu0 %v1556
        %1606 = vmatpush1.bf16.msra.mxu0 %v1555
        %1607 = vmatprep.subr.bf16.mxu0 %v1554
        %1608 = vmatpush1.bf16.msra.mxu0 %v1553
        %1609 = vmatprep.subr.bf16.mxu0 %v1552
        %1610 = vmatpush1.bf16.msra.mxu0 %v1551
        %1611 = vmatprep.subr.bf16.mxu0 %v1550
        %1612 = vmatpush1.bf16.msra.mxu0 %v1549
        %1613 = vmatprep.subr.bf16.mxu0 %v1548
        %1614 = vmatpush1.bf16.msra.mxu0 %v1547
        %1615 = vmatprep.subr.bf16.mxu0 %v1546
        %1616 = vmatpush1.bf16.msra.mxu0 %v1545
        %1617 = vmatprep.subr.bf16.mxu0 %v1544
        %1618 = vmatpush1.bf16.msra.mxu0 %v1543
        %1619 = vmatprep.subr.bf16.mxu0 %v1542
        %1620 = vmatpush1.bf16.msra.mxu0 %v1541
        %1621 = vmatprep.subr.bf16.mxu0 %v1572
        %1622 = vmatpush2.bf16.msra.mxu0 %v1571
        %1623 = vmatprep.subr.bf16.mxu0 %v1570
        %1624 = vmatpush2.bf16.msra.mxu0 %v1569
        %1625 = vmatprep.subr.bf16.mxu0 %v1568
        %1626 = vmatpush2.bf16.msra.mxu0 %v1567
        %1627 = vmatprep.subr.bf16.mxu0 %v1566
        %1628 = vmatpush2.bf16.msra.mxu0 %v1565
        %1629 = vmatprep.subr.bf16.mxu0 %v1564
        %1630 = vmatpush2.bf16.msra.mxu0 %v1563
        %1631 = vmatprep.subr.bf16.mxu0 %v1562
        %1632 = vmatpush2.bf16.msra.mxu0 %v1561
        %1633 = vmatprep.subr.bf16.mxu0 %v1560
        %1634 = vmatpush2.bf16.msra.mxu0 %v1559
        %1635 = vmatprep.subr.bf16.mxu0 %v1558
        %1636 = vmatpush2.bf16.msra.mxu0 %v1557
        %1637 = vmatprep.mubr.bf16.mxu0 %v1386
        %1638 = vmatmul.mubr.bf16.gmra.mxu0 %v1385
        %v1639 = vpop.f32.mrf.mxu0
        %v1640 = vadd.f32 %v1438, %v1639
        %v1641 = vpop.f32.mrf.mxu0
        %v1642 = vadd.f32 %v1442, %v1641
        %v1643 = vpop.f32.mrf.mxu0
        %v1644 = vadd.f32 %v1438, %v1643
        %v1645 = vpop.f32.mrf.mxu0
        %v1646 = vadd.f32 %v1442, %v1645
        %1647 = vmatprep.mubr.bf16.mxu0 %v1388
        %1648 = vmatmul.mubr.bf16.gmra.mxu0 %v1387
        %v1649 = vpop.f32.mrf.mxu0
        %v1650 = vadd.f32 %v1438, %v1649
        %v1651 = vpop.f32.mrf.mxu0
        %v1652 = vadd.f32 %v1442, %v1651
        %v1653 = vpop.f32.mrf.mxu0
        %v1654 = vadd.f32 %v1438, %v1653
        %v1655 = vpop.f32.mrf.mxu0
        %v1656 = vadd.f32 %v1442, %v1655
        %1657 = vmatprep.mubr.bf16.mxu0 %v1390
        %1658 = vmatmul.mubr.bf16.gmra.mxu0 %v1389
        %v1659 = vpop.f32.mrf.mxu0
        %v1660 = vadd.f32 %v1438, %v1659
        %v1661 = vpop.f32.mrf.mxu0
        %v1662 = vadd.f32 %v1442, %v1661
        %v1663 = vpop.f32.mrf.mxu0
        %v1664 = vadd.f32 %v1438, %v1663
        %v1665 = vpop.f32.mrf.mxu0
        %v1666 = vadd.f32 %v1442, %v1665
        %1667 = vmatprep.mubr.bf16.mxu0 %v1392
        %1668 = vmatmul.mubr.bf16.gmra.mxu0 %v1391
        %v1669 = vpop.f32.mrf.mxu0
        %v1670 = vadd.f32 %v1438, %v1669
        %v1671 = vpop.f32.mrf.mxu0
        %v1672 = vadd.f32 %v1442, %v1671
        %v1673 = vpop.f32.mrf.mxu0
        %v1674 = vadd.f32 %v1438, %v1673
        %v1675 = vpop.f32.mrf.mxu0
        %v1676 = vadd.f32 %v1442, %v1675
        %1677 = vmatprep.mubr.bf16.mxu0 %v1394
        %1678 = vmatmul.mubr.bf16.gmra.mxu0 %v1393
        %v1679 = vpop.f32.mrf.mxu0
        %v1680 = vadd.f32 %v1438, %v1679
        %v1681 = vpop.f32.mrf.mxu0
        %v1682 = vadd.f32 %v1442, %v1681
        %v1683 = vpop.f32.mrf.mxu0
        %v1684 = vadd.f32 %v1438, %v1683
        %v1685 = vpop.f32.mrf.mxu0
        %v1686 = vadd.f32 %v1442, %v1685
        %1687 = vmatprep.mubr.bf16.mxu0 %v1396
        %1688 = vmatmul.mubr.bf16.gmra.mxu0 %v1395
        %v1689 = vpop.f32.mrf.mxu0
        %v1690 = vadd.f32 %v1438, %v1689
        %v1691 = vpop.f32.mrf.mxu0
        %v1692 = vadd.f32 %v1442, %v1691
        %v1693 = vpop.f32.mrf.mxu0
        %v1694 = vadd.f32 %v1438, %v1693
        %v1695 = vpop.f32.mrf.mxu0
        %v1696 = vadd.f32 %v1442, %v1695
        %1697 = vmatprep.mubr.bf16.mxu0 %v1398
        %1698 = vmatmul.mubr.bf16.gmra.mxu0 %v1397
        %v1699 = vpop.f32.mrf.mxu0
        %v1700 = vadd.f32 %v1438, %v1699
        %v1701 = vpop.f32.mrf.mxu0
        %v1702 = vadd.f32 %v1442, %v1701
        %v1703 = vpop.f32.mrf.mxu0
        %v1704 = vadd.f32 %v1438, %v1703
        %v1705 = vpop.f32.mrf.mxu0
        %v1706 = vadd.f32 %v1442, %v1705
        %1707 = vmatprep.mubr.bf16.mxu0 %v1400
        %1708 = vmatmul.mubr.bf16.gmra.mxu0 %v1399
        %v1709 = vpop.f32.mrf.mxu0
        %v1710 = vadd.f32 %v1438, %v1709
        %v1711 = vpop.f32.mrf.mxu0
        %v1712 = vadd.f32 %v1442, %v1711
        %v1713 = vpop.f32.mrf.mxu0
        %v1714 = vadd.f32 %v1438, %v1713
        %v1715 = vpop.f32.mrf.mxu0
        %v1716 = vadd.f32 %v1442, %v1715
        %1717 = vdwg.mxu0
        %v1718 = vmax.f32 %v1640, 0.0
        %v1719 = vmax.f32 %v1642, 0.0
        %v1720 = vmax.f32 %v1644, 0.0
        %v1721 = vmax.f32 %v1646, 0.0
        %v1722 = vmax.f32 %v1650, 0.0
        %v1723 = vmax.f32 %v1652, 0.0
        %v1724 = vmax.f32 %v1654, 0.0
        %v1725 = vmax.f32 %v1656, 0.0
        %v1726 = vmax.f32 %v1660, 0.0
        %v1727 = vmax.f32 %v1662, 0.0
        %v1728 = vmax.f32 %v1664, 0.0
        %v1729 = vmax.f32 %v1666, 0.0
        %v1730 = vmax.f32 %v1670, 0.0
        %v1731 = vmax.f32 %v1672, 0.0
        %v1732 = vmax.f32 %v1674, 0.0
        %v1733 = vmax.f32 %v1676, 0.0
        %v1734 = vmax.f32 %v1680, 0.0
        %v1735 = vmax.f32 %v1682, 0.0
        %v1736 = vmax.f32 %v1684, 0.0
        %v1737 = vmax.f32 %v1686, 0.0
        %v1738 = vmax.f32 %v1690, 0.0
        %v1739 = vmax.f32 %v1692, 0.0
        %v1740 = vmax.f32 %v1694, 0.0
        %v1741 = vmax.f32 %v1696, 0.0
        %v1742 = vmax.f32 %v1700, 0.0
        %v1743 = vmax.f32 %v1702, 0.0
        %v1744 = vmax.f32 %v1704, 0.0
        %v1745 = vmax.f32 %v1706, 0.0
        %v1746 = vmax.f32 %v1710, 0.0
        %v1747 = vmax.f32 %v1712, 0.0
        %v1748 = vmax.f32 %v1714, 0.0
        %v1749 = vmax.f32 %v1716, 0.0
        %v1750 = vpack.c.bf16 %v1720, %v1718
        %v1751 = vpack.c.bf16 %v1721, %v1719
        %v1752 = vpack.c.bf16 %v1724, %v1722
        %v1753 = vpack.c.bf16 %v1725, %v1723
        %v1754 = vpack.c.bf16 %v1728, %v1726
        %v1755 = vpack.c.bf16 %v1729, %v1727
        %v1756 = vpack.c.bf16 %v1732, %v1730
        %v1757 = vpack.c.bf16 %v1733, %v1731
        %v1758 = vpack.c.bf16 %v1736, %v1734
        %v1759 = vpack.c.bf16 %v1737, %v1735
        %v1760 = vpack.c.bf16 %v1740, %v1738
        %v1761 = vpack.c.bf16 %v1741, %v1739
        %v1762 = vpack.c.bf16 %v1744, %v1742
        %v1763 = vpack.c.bf16 %v1745, %v1743
        %v1764 = vpack.c.bf16 %v1748, %v1746
        %v1765 = vpack.c.bf16 %v1749, %v1747
        %v1766 = vld [vmem:[%s8] sm:$0xf]
        %v1767 = vld [vmem:[%s8 + $0x4] sm:$0xf]
        %v1768 = vld [vmem:[%s8 + $0x8] sm:$0xf]
        %v1769 = vld [vmem:[%s8 + $0xc] sm:$0xf]
        %v1770 = vld [vmem:[%s8 + $0x10] sm:$0xf]
        %v1771 = vld [vmem:[%s8 + $0x14] sm:$0xf]
        %v1772 = vld [vmem:[%s8 + $0x18] sm:$0xf]
        %v1773 = vld [vmem:[%s8 + $0x1c] sm:$0xf]
        %v1774 = vld [vmem:[%s8 + $0x20] sm:$0xf]
        %v1775 = vld [vmem:[%s8 + $0x24] sm:$0xf]
        %v1776 = vld [vmem:[%s8 + $0x28] sm:$0xf]
        %v1777 = vld [vmem:[%s8 + $0x2c] sm:$0xf]
        %v1778 = vld [vmem:[%s8 + $0x30] sm:$0xf]
        %v1779 = vld [vmem:[%s8 + $0x34] sm:$0xf]
        %v1780 = vld [vmem:[%s8 + $0x38] sm:$0xf]
        %v1781 = vld [vmem:[%s8 + $0x3c] sm:$0xf]
        %v1782 = vld [vmem:[%s8 + $0x40] sm:$0xf]
        %v1783 = vld [vmem:[%s8 + $0x44] sm:$0xf]
        %v1784 = vld [vmem:[%s8 + $0x48] sm:$0xf]
        %v1785 = vld [vmem:[%s8 + $0x4c] sm:$0xf]
        %v1786 = vld [vmem:[%s8 + $0x50] sm:$0xf]
        %v1787 = vld [vmem:[%s8 + $0x54] sm:$0xf]
        %v1788 = vld [vmem:[%s8 + $0x58] sm:$0xf]
        %v1789 = vld [vmem:[%s8 + $0x5c] sm:$0xf]
        %v1790 = vld [vmem:[%s8 + $0x60] sm:$0xf]
        %v1791 = vld [vmem:[%s8 + $0x64] sm:$0xf]
        %v1792 = vld [vmem:[%s8 + $0x68] sm:$0xf]
        %v1793 = vld [vmem:[%s8 + $0x6c] sm:$0xf]
        %v1794 = vld [vmem:[%s8 + $0x70] sm:$0xf]
        %v1795 = vld [vmem:[%s8 + $0x74] sm:$0xf]
        %v1796 = vld [vmem:[%s8 + $0x78] sm:$0xf]
        %v1797 = vld [vmem:[%s8 + $0x7c] sm:$0xf]
        %v1830 = vunpack.c.l.b16 %v1766
        %v1831 = vunpack.c.l.b16 %v1767
        %v1832 = vunpack.c.l.b16 %v1768
        %v1833 = vunpack.c.l.b16 %v1769
        %v1834 = vunpack.c.l.b16 %v1770
        %v1835 = vunpack.c.l.b16 %v1771
        %v1836 = vunpack.c.l.b16 %v1772
        %v1837 = vunpack.c.l.b16 %v1773
        %v1838 = vunpack.c.l.b16 %v1774
        %v1839 = vunpack.c.l.b16 %v1775
        %v1840 = vunpack.c.l.b16 %v1776
        %v1841 = vunpack.c.l.b16 %v1777
        %v1842 = vunpack.c.l.b16 %v1778
        %v1843 = vunpack.c.l.b16 %v1779
        %v1844 = vunpack.c.l.b16 %v1780
        %v1845 = vunpack.c.l.b16 %v1781
        %v1846 = vunpack.c.l.b16 %v1782
        %v1847 = vunpack.c.l.b16 %v1783
        %v1848 = vunpack.c.l.b16 %v1784
        %v1849 = vunpack.c.l.b16 %v1785
        %v1850 = vunpack.c.l.b16 %v1786
        %v1851 = vunpack.c.l.b16 %v1787
        %v1852 = vunpack.c.l.b16 %v1788
        %v1853 = vunpack.c.l.b16 %v1789
        %v1854 = vunpack.c.l.b16 %v1790
        %v1855 = vunpack.c.l.b16 %v1791
        %v1856 = vunpack.c.l.b16 %v1792
        %v1857 = vunpack.c.l.b16 %v1793
        %v1858 = vunpack.c.l.b16 %v1794
        %v1859 = vunpack.c.l.b16 %v1795
        %v1860 = vunpack.c.l.b16 %v1796
        %v1861 = vunpack.c.l.b16 %v1797
        %v1862 = vpack.c.b16 %v1831, %v1830
        %v1863 = vpack.c.b16 %v1833, %v1832
        %v1864 = vpack.c.b16 %v1835, %v1834
        %v1865 = vpack.c.b16 %v1837, %v1836
        %v1866 = vpack.c.b16 %v1839, %v1838
        %v1867 = vpack.c.b16 %v1841, %v1840
        %v1868 = vpack.c.b16 %v1843, %v1842
        %v1869 = vpack.c.b16 %v1845, %v1844
        %v1870 = vpack.c.b16 %v1847, %v1846
        %v1871 = vpack.c.b16 %v1849, %v1848
        %v1872 = vpack.c.b16 %v1851, %v1850
        %v1873 = vpack.c.b16 %v1853, %v1852
        %v1874 = vpack.c.b16 %v1855, %v1854
        %v1875 = vpack.c.b16 %v1857, %v1856
        %v1876 = vpack.c.b16 %v1859, %v1858
        %v1877 = vpack.c.b16 %v1861, %v1860
        %1894 = vmatprep.subr.bf16.mxu0 0
        %1895 = vmatpush1.bf16.msra.mxu0 %v1869
        %1896 = vmatprep.subr.bf16.mxu0 0
        %1897 = vmatpush1.bf16.msra.mxu0 %v1868
        %1898 = vmatprep.subr.bf16.mxu0 0
        %1899 = vmatpush1.bf16.msra.mxu0 %v1867
        %1900 = vmatprep.subr.bf16.mxu0 0
        %1901 = vmatpush1.bf16.msra.mxu0 %v1866
        %1902 = vmatprep.subr.bf16.mxu0 0
        %1903 = vmatpush1.bf16.msra.mxu0 %v1865
        %1904 = vmatprep.subr.bf16.mxu0 0
        %1905 = vmatpush1.bf16.msra.mxu0 %v1864
        %1906 = vmatprep.subr.bf16.mxu0 0
        %1907 = vmatpush1.bf16.msra.mxu0 %v1863
        %1908 = vmatprep.subr.bf16.mxu0 0
        %1909 = vmatpush1.bf16.msra.mxu0 %v1862
        %1910 = vmatprep.subr.bf16.mxu0 0
        %1911 = vmatpush2.bf16.msra.mxu0 %v1877
        %1912 = vmatprep.subr.bf16.mxu0 0
        %1913 = vmatpush2.bf16.msra.mxu0 %v1876
        %1914 = vmatprep.subr.bf16.mxu0 0
        %1915 = vmatpush2.bf16.msra.mxu0 %v1875
        %1916 = vmatprep.subr.bf16.mxu0 0
        %1917 = vmatpush2.bf16.msra.mxu0 %v1874
        %1918 = vmatprep.subr.bf16.mxu0 0
        %1919 = vmatpush2.bf16.msra.mxu0 %v1873
        %1920 = vmatprep.subr.bf16.mxu0 0
        %1921 = vmatpush2.bf16.msra.mxu0 %v1872
        %1922 = vmatprep.subr.bf16.mxu0 0
        %1923 = vmatpush2.bf16.msra.mxu0 %v1871
        %1924 = vmatprep.subr.bf16.mxu0 0
        %1925 = vmatpush2.bf16.msra.mxu0 %v1870
        %1926 = vmatprep.mubr.bf16.mxu0 %v1751
        %1927 = vmatmul.mubr.bf16.gmra.mxu0 %v1750
        %v1928 = vpop.f32.mrf.mxu0
        %v1929 = vadd.f32 0.0, %v1928
        %v1930 = vpop.f32.mrf.mxu0
        %v1931 = vpop.f32.mrf.mxu0
        %v1932 = vadd.f32 0.0, %v1931
        %v1933 = vpop.f32.mrf.mxu0
        %1934 = vmatprep.mubr.bf16.mxu0 %v1753
        %1935 = vmatmul.mubr.bf16.gmra.mxu0 %v1752
        %v1936 = vpop.f32.mrf.mxu0
        %v1937 = vadd.f32 0.0, %v1936
        %v1938 = vpop.f32.mrf.mxu0
        %v1939 = vpop.f32.mrf.mxu0
        %v1940 = vadd.f32 0.0, %v1939
        %v1941 = vpop.f32.mrf.mxu0
        %1942 = vmatprep.mubr.bf16.mxu0 %v1755
        %1943 = vmatmul.mubr.bf16.gmra.mxu0 %v1754
        %v1944 = vpop.f32.mrf.mxu0
        %v1945 = vadd.f32 0.0, %v1944
        %v1946 = vpop.f32.mrf.mxu0
        %v1947 = vpop.f32.mrf.mxu0
        %v1948 = vadd.f32 0.0, %v1947
        %v1949 = vpop.f32.mrf.mxu0
        %1950 = vmatprep.mubr.bf16.mxu0 %v1757
        %1951 = vmatmul.mubr.bf16.gmra.mxu0 %v1756
        %v1952 = vpop.f32.mrf.mxu0
        %v1953 = vadd.f32 0.0, %v1952
        %v1954 = vpop.f32.mrf.mxu0
        %v1955 = vpop.f32.mrf.mxu0
        %v1956 = vadd.f32 0.0, %v1955
        %v1957 = vpop.f32.mrf.mxu0
        %1958 = vmatprep.mubr.bf16.mxu0 %v1759
        %1959 = vmatmul.mubr.bf16.gmra.mxu0 %v1758
        %v1960 = vpop.f32.mrf.mxu0
        %v1961 = vadd.f32 0.0, %v1960
        %v1962 = vpop.f32.mrf.mxu0
        %v1963 = vpop.f32.mrf.mxu0
        %v1964 = vadd.f32 0.0, %v1963
        %v1965 = vpop.f32.mrf.mxu0
        %1966 = vmatprep.mubr.bf16.mxu0 %v1761
        %1967 = vmatmul.mubr.bf16.gmra.mxu0 %v1760
        %v1968 = vpop.f32.mrf.mxu0
        %v1969 = vadd.f32 0.0, %v1968
        %v1970 = vpop.f32.mrf.mxu0
        %v1971 = vpop.f32.mrf.mxu0
        %v1972 = vadd.f32 0.0, %v1971
        %v1973 = vpop.f32.mrf.mxu0
        %1974 = vmatprep.mubr.bf16.mxu0 %v1763
        %1975 = vmatmul.mubr.bf16.gmra.mxu0 %v1762
        %v1976 = vpop.f32.mrf.mxu0
        %v1977 = vadd.f32 0.0, %v1976
        %v1978 = vpop.f32.mrf.mxu0
        %v1979 = vpop.f32.mrf.mxu0
        %v1980 = vadd.f32 0.0, %v1979
        %v1981 = vpop.f32.mrf.mxu0
        %1982 = vmatprep.mubr.bf16.mxu0 %v1765
        %1983 = vmatmul.mubr.bf16.gmra.mxu0 %v1764
        %v1984 = vpop.f32.mrf.mxu0
        %v1985 = vadd.f32 0.0, %v1984
        %v1986 = vpop.f32.mrf.mxu0
        %v1987 = vpop.f32.mrf.mxu0
        %v1988 = vadd.f32 0.0, %v1987
        %v1989 = vpop.f32.mrf.mxu0
        %1990 = vdwg.mxu0
        %1992 = vset.pattern.permute.xlu0 0
        %1993 = vperm.xlu0 %1992, %v1020
        %v1994 = vpop.permute.xlu0 %1993
        %1997 = vset.pattern.permute.xlu0 0
        %1998 = vperm.xlu0 %1997, %v1021
        %v1999 = vpop.permute.xlu0 %1998
        %2002 = vset.pattern.permute.xlu0 0
        %2003 = vperm.xlu0 %2002, %v1022
        %v2004 = vpop.permute.xlu0 %2003
        %2007 = vset.pattern.permute.xlu0 0
        %2008 = vperm.xlu0 %2007, %v1023
        %v2009 = vpop.permute.xlu0 %2008
        %2012 = vset.pattern.permute.xlu0 0
        %2013 = vperm.xlu0 %2012, %v1024
        %v2014 = vpop.permute.xlu0 %2013
        %2017 = vset.pattern.permute.xlu0 0
        %2018 = vperm.xlu0 %2017, %v1025
        %v2019 = vpop.permute.xlu0 %2018
        %2022 = vset.pattern.permute.xlu0 0
        %2023 = vperm.xlu0 %2022, %v1026
        %v2024 = vpop.permute.xlu0 %2023
        %2027 = vset.pattern.permute.xlu0 0
        %2028 = vperm.xlu0 %2027, %v1027
        %v2029 = vpop.permute.xlu0 %2028
        %2032 = vset.pattern.permute.xlu0 0
        %2033 = vperm.xlu0 %2032, %v1028
        %v2034 = vpop.permute.xlu0 %2033
        %2037 = vset.pattern.permute.xlu0 0
        %2038 = vperm.xlu0 %2037, %v1029
        %v2039 = vpop.permute.xlu0 %2038
        %2042 = vset.pattern.permute.xlu0 0
        %2043 = vperm.xlu0 %2042, %v1030
        %v2044 = vpop.permute.xlu0 %2043
        %2047 = vset.pattern.permute.xlu0 0
        %2048 = vperm.xlu0 %2047, %v1031
        %v2049 = vpop.permute.xlu0 %2048
        %2052 = vset.pattern.permute.xlu0 0
        %2053 = vperm.xlu0 %2052, %v1032
        %v2054 = vpop.permute.xlu0 %2053
        %2057 = vset.pattern.permute.xlu0 0
        %2058 = vperm.xlu0 %2057, %v1033
        %v2059 = vpop.permute.xlu0 %2058
        %2062 = vset.pattern.permute.xlu0 0
        %2063 = vperm.xlu0 %2062, %v1034
        %v2064 = vpop.permute.xlu0 %2063
        %2067 = vset.pattern.permute.xlu0 0
        %2068 = vperm.xlu0 %2067, %v1035
        %v2069 = vpop.permute.xlu0 %2068
        %v2071 = vadd.f32 %v1994, %v1929
        %v2072 = vadd.f32 %v1999, %v1932
        %v2073 = vadd.f32 %v2004, %v1937
        %v2074 = vadd.f32 %v2009, %v1940
        %v2075 = vadd.f32 %v2014, %v1945
        %v2076 = vadd.f32 %v2019, %v1948
        %v2077 = vadd.f32 %v2024, %v1953
        %v2078 = vadd.f32 %v2029, %v1956
        %v2079 = vadd.f32 %v2034, %v1961
        %v2080 = vadd.f32 %v2039, %v1964
        %v2081 = vadd.f32 %v2044, %v1969
        %v2082 = vadd.f32 %v2049, %v1972
        %v2083 = vadd.f32 %v2054, %v1977
        %v2084 = vadd.f32 %v2059, %v1980
        %v2085 = vadd.f32 %v2064, %v1985
        %v2086 = vadd.f32 %v2069, %v1988
        %2087 = vst.msk [vmem:[%s376] sm:$0xff] %vm939, %v2071
        %2088 = vst.msk [vmem:[%s376 + $0x8] sm:$0xff] %vm939, %v2072
        %2089 = vst.msk [vmem:[%s376 + $0x10] sm:$0xff] %vm939, %v2073
        %2090 = vst.msk [vmem:[%s376 + $0x18] sm:$0xff] %vm939, %v2074
        %2091 = vst.msk [vmem:[%s376 + $0x20] sm:$0xff] %vm939, %v2075
        %2092 = vst.msk [vmem:[%s376 + $0x28] sm:$0xff] %vm939, %v2076
        %2093 = vst.msk [vmem:[%s376 + $0x30] sm:$0xff] %vm939, %v2077
        %2094 = vst.msk [vmem:[%s376 + $0x38] sm:$0xff] %vm939, %v2078
        %2095 = vst.msk [vmem:[%s376 + $0x40] sm:$0xff] %vm939, %v2079
        %2096 = vst.msk [vmem:[%s376 + $0x48] sm:$0xff] %vm939, %v2080
        %2097 = vst.msk [vmem:[%s376 + $0x50] sm:$0xff] %vm939, %v2081
        %2098 = vst.msk [vmem:[%s376 + $0x58] sm:$0xff] %vm939, %v2082
        %2099 = vst.msk [vmem:[%s376 + $0x60] sm:$0xff] %vm939, %v2083
        %2100 = vst.msk [vmem:[%s376 + $0x68] sm:$0xff] %vm939, %v2084
        %2101 = vst.msk [vmem:[%s376 + $0x70] sm:$0xff] %vm939, %v2085
        %2102 = vst.msk [vmem:[%s376 + $0x78] sm:$0xff] %vm939, %v2086
        %s2103 = smul.u32 16, %s23
        %p2104 = scmp.lt.s32.totalorder %s2103, 79
        %s2105 = scalar_select %p2104, %s2103, 79
        %s2106 = smul.addr %s2105, 8
        %s2107 = scalar_lea.vmem %s9, %s2106
        // Predicated region
        $region61: #{tpu_custom_call.1} parent=55 // pred_check
          %p2108 = pneg %p240
        $region62: #{tpu_custom_call.1} parent=55 // pred_check_branch
          %2110 = sbr.rel (%p2108) target = $region64
        $region63: #{tpu_custom_call.1} parent=55 // pred_region
          %s2111 = smul.u32 16, %s23
        $region64: #{tpu_custom_call.1} parent=55 // pred_fallthru
          _
      $region56: #{tpu_custom_call.1} parent=5 // pred_fallthru
        _
      %p2112 = scmp.le.s32.totalorder 2, %s18
      // Predicated region
      $region65: #{tpu_custom_call.1} parent=5 // pred_check
        %p2113 = pneg %p2112
      $region66: #{tpu_custom_call.1} parent=5 // pred_check_branch
        %2115 = sbr.rel (%p2113) target = $region68
      $region67: #{tpu_custom_call.1} parent=5 // pred_region
        %s2116 = ssub.s32 %s18, 2
        // Predicated region
        $region69: #{tpu_custom_call.1} parent=67 // pred_check
          %p2117 = pneg %p246
        $region70: #{tpu_custom_call.1} parent=67 // pred_check_branch
          %2119 = sbr.rel (%p2117) target = $region72
        $region71: #{tpu_custom_call.1} parent=67 // pred_region
          %s2120 = smul.u32 16, %s24
          %p2121 = scmp.lt.s32.totalorder %s2120, 79
          %s2122 = scalar_select %p2121, %s2120, 79
          %s2123 = smul.addr %s2122, 8
          %s2124 = scalar_lea.vmem %s9, %s2123
        $region72: #{tpu_custom_call.1} parent=67 // pred_fallthru
          _
      $region68: #{tpu_custom_call.1} parent=5 // pred_fallthru
        _
    $region6: #{tpu_custom_call.1} parent=1 // loop_footer
      %s22 = sadd.s32 1, %s18
    $region7: #{tpu_custom_call.1} parent=1 // loop_footer_branch
      %17 = sbr.rel target = $region3
    $region8: #{tpu_custom_call.1} parent=1 // loop_exit
      _
    %2125 = vsyncpa [#allocation4], 1
    %s2126 = scalar_lea.sflag [#allocation4], 1
    %2127 = vsyncpa %s2126, 1

</llo_original>
